<compile_context>
chip_gen: v5e
topology: v5e:2x2
jax: 0.10.0
libtpu: 0.0.40
codegen_flags: <defaults>
</compile_context>

<pallas_src>
import functools
import math

import jax
import jax.numpy as jnp
from jax.experimental import pallas as pl
from jax.experimental.pallas import tpu as pltpu


# ----------------------------- in-kernel helpers -----------------------------

def _layer_norm(x, gamma, beta, eps):
    # PyTorch LayerNorm: biased variance over the last dim (f32 throughout).
    mean = jnp.mean(x, axis=-1, keepdims=True)
    var = jnp.mean((x - mean) ** 2, axis=-1, keepdims=True)
    return (x - mean) * jax.lax.rsqrt(var + eps) * gamma + beta


def _gelu_tanh(x):
    # tanh-approximate GELU: one EUP tanh + a few VPU muls on the (Tq, I) tensor.
    # Max abs deviation from exact erf-GELU is ~3e-3 (inference-grade).
    c = math.sqrt(2.0 / math.pi)
    return 0.5 * x * (1.0 + jnp.tanh(c * (x + 0.044715 * x * x * x)))


# --------------------------------- the kernel --------------------------------

def gpt2_layer_kernel(
    xs_ref, mask_ref,
    ln1_g_ref, ln1_b_ref,
    wq_ref, bq_ref, wk_ref, bk_ref, wv_ref, bv_ref,
    wo_ref, bo_ref,
    ln2_g_ref, ln2_b_ref,
    w1_ref, b1_ref, w2_ref, b2_ref,
    out_ref,
    k_scr, v_scr,
    *, num_heads, eps,
):
    f32 = jnp.float32
    bf16 = jnp.bfloat16
    nh = num_heads

    T, H = xs_ref.shape[1], xs_ref.shape[2]
    Tq = out_ref.shape[1]
    d = H // nh
    scale = 1.0 / math.sqrt(d)
    qt = pl.program_id(1)                      # query-tile index (sequential axis)

    ln1_g = ln1_g_ref[0]
    ln1_b = ln1_b_ref[0]

    # ----- K/V hoist: once per batch element (first query tile only) -----
    @pl.when(qt == 0)
    def _compute_kv():
        x_all = xs_ref[0].astype(f32)                                   # (T, H)
        xn_all = _layer_norm(x_all, ln1_g, ln1_b, eps).astype(bf16)
        k = jnp.dot(xn_all, wk_ref[...], preferred_element_type=f32) + bk_ref[0]
        v = jnp.dot(xn_all, wv_ref[...], preferred_element_type=f32) + bv_ref[0]
        # Head-major (nh, T, d) bf16, written per head via static lane slices;
        # reused by every query tile of this batch element.
        for h in range(nh):
            k_scr[h] = k[:, h * d:(h + 1) * d].astype(bf16)
            v_scr[h] = v[:, h * d:(h + 1) * d].astype(bf16)

    # ----- attention sublayer (pre-norm), this query tile -----
    start = pl.multiple_of(qt * Tq, Tq)
    x_q = xs_ref[0, pl.ds(start, Tq), :].astype(f32)                    # (Tq, H)
    xn_q = _layer_norm(x_q, ln1_g, ln1_b, eps)
    q = jnp.dot(xn_q.astype(bf16), wq_ref[...], preferred_element_type=f32) + bq_ref[0]
    q = q * scale                               # fold 1/sqrt(d) into q once
    q3 = jnp.stack([q[:, h * d:(h + 1) * d] for h in range(nh)], axis=0).astype(bf16)

    # One additive mask (causal + key padding), shared by all heads.
    amask = mask_ref[0].astype(f32)                                     # (1, T)
    row = start + jax.lax.broadcasted_iota(jnp.int32, (Tq, T), 0)
    col = jax.lax.broadcasted_iota(jnp.int32, (Tq, T), 1)
    mask_add = jnp.where(col <= row, 0.0, -1e9).astype(f32) + amask     # (Tq, T)

    # Batched (leading head dim) attention: f32 scores/softmax, bf16 MXU inputs.
    # TODO(synk)-adjacent note: for very long T, kv-tile this with an online
    # softmax to bound score VMEM and skip fully-masked causal tiles.
    s = jnp.einsum("hqd,hkd->hqk", q3, k_scr[...],
                   preferred_element_type=f32)                          # (nh,Tq,T)
    s = s + mask_add[None, :, :]
    s = s - jnp.max(s, axis=-1, keepdims=True)
    p = jnp.exp(s)
    denom = jnp.sum(p, axis=-1, keepdims=True)                          # (nh,Tq,1)

    # Un-normalized probs into the PV matmul; normalize the (nh,Tq,d) result
    # instead of the (nh,Tq,T) score tensor (post-PV normalization).
    o3 = jnp.einsum("hqk,hkd->hqd", p.astype(bf16), v_scr[...],
                    preferred_element_type=f32)
    o3 = o3 * pl.reciprocal(denom, approx=True)                         # EUP recip
    attn = jnp.concatenate([o3[h] for h in range(nh)], axis=-1)         # (Tq, H)

    attn = jnp.dot(attn.astype(bf16), wo_ref[...], preferred_element_type=f32) + bo_ref[0]
    # attention_dropout: identity in eval mode
    xr = x_q + attn

    # ----- feed-forward sublayer (pre-norm) -----
    xn2 = _layer_norm(xr, ln2_g_ref[0], ln2_b_ref[0], eps)
    hmid = jnp.dot(xn2.astype(bf16), w1_ref[...], preferred_element_type=f32) + b1_ref[0]
    hmid = _gelu_tanh(hmid)
    ff = jnp.dot(hmid.astype(bf16), w2_ref[...], preferred_element_type=f32) + b2_ref[0]
    # out_dropout: identity in eval mode
    out_ref[0] = (xr + ff).astype(out_ref.dtype)


# --------------------------------- wrapper ------------------------------------

def _vmem_limit_bytes(T, Tq, H, I, nh):
    """Rough per-core VMEM footprint -> scoped limit, clamped under v7x's 64 MiB."""
    d = H // nh
    dl = max(d, 128)                            # lane padding of the head-minor scratch
    bf, f4 = 2, 4
    weights = (4 * H * H + 2 * H * I) * bf      # bf16 weights, single-buffered
    small = (8 * H + I) * f4 * 4                # biases + LN params (+ padding slack)
    x_in = 2 * T * H * f4                       # double-buffered full-seq hidden block
    mask = 2 * max(T, 128) * f4
    kv_scr = 2 * nh * T * dl * bf               # persistent K/V scratch
    scores = nh * Tq * T * (f4 + bf)            # f32 scores + bf16 copy
    attn_io = nh * Tq * dl * f4 + 4 * Tq * H * f4
    mlp = Tq * I * (f4 + bf)
    out = 2 * Tq * H * f4
    est = weights + small + x_in + mask + kv_scr + scores + attn_io + mlp + out
    est = int(est * 1.5) + (8 << 20)            # headroom for compiler temporaries
    return max(32 << 20, min(est, 60 << 20))


def gpt2_layer(x, attn_mask, params, *, num_heads, eps=1e-5, q_tile=256):
    B, T, H = x.shape
    I = params["w1"].shape[1]
    d = H // num_heads

    # Query-tile size: full sequence for small T, otherwise a 256-row tile
    # (multiple of 8 for sublane tiling; 128/256 match the MXU widths).
    Tq = T if T <= q_tile else q_tile
    if T % Tq != 0:
        raise ValueError(f"T={T} must be divisible by the query tile {Tq}")
    nqt = T // Tq

    bf16 = jnp.bfloat16
    # MXU-facing weight matrices in bf16 (f32 accumulation happens in-kernel);
    # biases and LayerNorm params stay f32.
    wq = params["wq"].astype(bf16)
    wk = params["wk"].astype(bf16)
    wv = params["wv"].astype(bf16)
    wo = params["wo"].astype(bf16)
    w1 = params["w1"].astype(bf16)
    w2 = params["w2"].astype(bf16)

    # Grid-invariant (weight/bias/LN) specs: block index never changes, so
    # single-buffer them to halve their resident VMEM footprint.
    def const_spec(shape):
        nd = len(shape)
        return pl.BlockSpec(shape, lambda b, t, _nd=nd: (0,) * _nd,
                            pipeline_mode=pl.Buffered(1))

    in_specs = [
        pl.BlockSpec((1, T, H), lambda b, t: (b, 0, 0)),    # full-seq hidden (K/V + query slices)
        pl.BlockSpec((1, 1, T), lambda b, t: (b, 0, 0)),    # additive attention mask
        const_spec((1, H)), const_spec((1, H)),             # ln1 gamma, beta
        const_spec((H, H)), const_spec((1, H)),             # Wq, bq
        const_spec((H, H)), const_spec((1, H)),             # Wk, bk
        const_spec((H, H)), const_spec((1, H)),             # Wv, bv
        const_spec((H, H)), const_spec((1, H)),             # attention_dense W, b
        const_spec((1, H)), const_spec((1, H)),             # ln2 gamma, beta
        const_spec((H, I)), const_spec((1, I)),             # interm_dense W, b
        const_spec((I, H)), const_spec((1, H)),             # out_dense W, b
    ]

    operands = (
        x, attn_mask,
        params["ln1_g"], params["ln1_b"],
        wq, params["bq"], wk, params["bk"], wv, params["bv"],
        wo, params["bo"],
        params["ln2_g"], params["ln2_b"],
        w1, params["b1"], w2, params["b2"],
    )

    # Advisory cost estimate (qkv + out proj + QK^T + PV + two MLP matmuls);
    # K/V projections now really are computed once per batch element.
    flops = int(B * (8 * T * H * H + 4 * T * T * H + 4 * T * H * I))
    transcendentals = int(B * (num_heads * T * T + T * I))
    bytes_accessed = int(sum(a.size * a.dtype.itemsize for a in operands)
                         + x.size * x.dtype.itemsize)

    kernel = functools.partial(gpt2_layer_kernel, num_heads=num_heads, eps=eps)

    return pl.pallas_call(
        kernel,
        grid=(B, nqt),
        in_specs=in_specs,
        out_specs=pl.BlockSpec((1, Tq, H), lambda b, t: (b, t, 0)),
        out_shape=jax.ShapeDtypeStruct((B, T, H), x.dtype),
        scratch_shapes=[
            pltpu.VMEM((num_heads, T, d), jnp.bfloat16),    # K, head-major, per-batch
            pltpu.VMEM((num_heads, T, d), jnp.bfloat16),    # V, head-major, per-batch
        ],
        compiler_params=pltpu.CompilerParams(
            # Batch is sharded across TensorCores (v7x megacore); the query-tile
            # axis carries the K/V scratch so it must be sequential ("arbitrary").
            dimension_semantics=("parallel", "arbitrary"),
            vmem_limit_bytes=_vmem_limit_bytes(T, Tq, H, I, num_heads),
        ),
        cost_estimate=pl.CostEstimate(
            flops=flops,
            transcendentals=transcendentals,
            bytes_accessed=bytes_accessed,
        ),
    )(*operands)


# ------------------------------ pure-JAX reference -----------------------------

def gpt2_layer_ref(x, attn_mask, p, *, num_heads, eps=1e-5):
    B, T, H = x.shape
    d = H // num_heads

    def ln(x, g, b):
        m = x.mean(-1, keepdims=True)
        v = ((x - m) ** 2).mean(-1, keepdims=True)
        return (x - m) / jnp.sqrt(v + eps) * g + b

    xn = ln(x, p["ln1_g"], p["ln1_b"])
    q = xn @ p["wq"] + p["bq"]
    k = xn @ p["wk"] + p["bk"]
    v = xn @ p["wv"] + p["bv"]
    qh = q.reshape(B, T, num_heads, d).transpose(0, 2, 1, 3)
    kh = k.reshape(B, T, num_heads, d).transpose(0, 2, 1, 3)
    vh = v.reshape(B, T, num_heads, d).transpose(0, 2, 1, 3)
    s = (qh @ kh.transpose(0, 1, 3, 2)) / math.sqrt(d)
    causal = jnp.tril(jnp.ones((T, T), bool))
    s = jnp.where(causal[None, None], s, -1e9) + attn_mask[:, :, None, :]
    a = jax.nn.softmax(s, axis=-1)
    o = (a @ vh).transpose(0, 2, 1, 3).reshape(B, T, H)
    o = o @ p["wo"] + p["bo"]
    x = x + o
    xn2 = ln(x, p["ln2_g"], p["ln2_b"])
    ff = jax.nn.gelu(xn2 @ p["w1"] + p["b1"], approximate=False)
    ff = ff @ p["w2"] + p["b2"]
    return x + ff


# ----------------------------------- main --------------------------------------

def _make_params(key, H, I):
    ks = jax.random.split(key, 12)

    def w(k, shape, scale=0.02):
        return (scale * jax.random.normal(k, shape)).astype(jnp.float32)

    return {
        "ln1_g": jnp.ones((1, H), jnp.float32),
        "ln1_b": jnp.zeros((1, H), jnp.float32),
        "wq": w(ks[0], (H, H)), "bq": w(ks[1], (1, H)),
        "wk": w(ks[2], (H, H)), "bk": w(ks[3], (1, H)),
        "wv": w(ks[4], (H, H)), "bv": w(ks[5], (1, H)),
        "wo": w(ks[6], (H, H)), "bo": w(ks[7], (1, H)),
        "ln2_g": jnp.ones((1, H), jnp.float32),
        "ln2_b": jnp.zeros((1, H), jnp.float32),
        "w1": w(ks[8], (H, I)), "b1": w(ks[9], (1, I)),
        "w2": w(ks[10], (I, H)), "b2": w(ks[11], (1, H)),
    }


def _check(B, T, H, num_heads, q_tile, eps, seed):
    I = 4 * H
    params = _make_params(jax.random.PRNGKey(0), H, I)
    kx, _ = jax.random.split(jax.random.PRNGKey(seed))
    x = jax.random.normal(kx, (B, T, H), jnp.float32)

    # Additive attention mask [B, 1, T]: batch 1 masks out the last 2 key positions.
    attn_mask = jnp.zeros((B, 1, T), jnp.float32)
    attn_mask = attn_mask.at[1, 0, T - 2:].set(-10000.0)

    out = gpt2_layer(x, attn_mask, params, num_heads=num_heads, eps=eps, q_tile=q_tile)
    out = jax.block_until_ready(out)
    ref = gpt2_layer_ref(x, attn_mask, params, num_heads=num_heads, eps=eps)

    # bf16 MXU inputs + tanh-GELU + approx reciprocal => bf16-level tolerance
    # against the exact-f32 reference.
    if not jnp.allclose(out, ref, atol=1e-2, rtol=1e-2):
        raise AssertionError(
            f"mismatch (B={B},T={T},Tq={q_tile}): "
            f"max abs err {float(jnp.max(jnp.abs(out - ref)))}")


if __name__ == "__main__":
    eps = 1e-5
    # Single query tile (T <= q_tile): K/V hoist path runs once per batch element.
    _check(B=2, T=8, H=32, num_heads=4, q_tile=256, eps=eps, seed=1)
    # Multi query tile (nqt=2): exercises K/V scratch reuse across query tiles.
    _check(B=2, T=16, H=32, num_heads=4, q_tile=8, eps=eps, seed=2)
    print("KERNEL_OK")
</pallas_src>

<mosaic_0001>
module attributes {stable_mosaic.version = 11 : i64} {
  func.func @gpt2_layer_kernel(%arg0: i32, %arg1: i32, %arg2: memref<1x8x32xf32, #tpu.memory_space<vmem>>, %arg3: memref<1x1x8xf32, #tpu.memory_space<vmem>>, %arg4: memref<1x32xf32, #tpu.memory_space<vmem>>, %arg5: memref<1x32xf32, #tpu.memory_space<vmem>>, %arg6: memref<32x32xbf16, #tpu.memory_space<vmem>>, %arg7: memref<1x32xf32, #tpu.memory_space<vmem>>, %arg8: memref<32x32xbf16, #tpu.memory_space<vmem>>, %arg9: memref<1x32xf32, #tpu.memory_space<vmem>>, %arg10: memref<32x32xbf16, #tpu.memory_space<vmem>>, %arg11: memref<1x32xf32, #tpu.memory_space<vmem>>, %arg12: memref<32x32xbf16, #tpu.memory_space<vmem>>, %arg13: memref<1x32xf32, #tpu.memory_space<vmem>>, %arg14: memref<1x32xf32, #tpu.memory_space<vmem>>, %arg15: memref<1x32xf32, #tpu.memory_space<vmem>>, %arg16: memref<32x128xbf16, #tpu.memory_space<vmem>>, %arg17: memref<1x128xf32, #tpu.memory_space<vmem>>, %arg18: memref<128x32xbf16, #tpu.memory_space<vmem>>, %arg19: memref<1x32xf32, #tpu.memory_space<vmem>>, %arg20: memref<1x8x32xf32, #tpu.memory_space<vmem>>, %arg21: memref<4x8x8xbf16, #tpu.memory_space<vmem>>, %arg22: memref<4x8x8xbf16, #tpu.memory_space<vmem>>) attributes {dimension_semantics = [#tpu.dimension_semantics<parallel>, #tpu.dimension_semantics<arbitrary>], iteration_bounds = array<i64: 2, 1>, scalar_prefetch = 0 : i64, scratch_operands = 2 : i64, tpu.core_type = #tpu.core_type<tc>, window_params = [{transform_indices = @transform_0, window_bounds = array<i64: 1, 8, 32>}, {transform_indices = @transform_1, window_bounds = array<i64: 1, 1, 8>}, {pipeline_mode = #tpu.pipeline_mode<synchronous>, transform_indices = @transform_2, window_bounds = array<i64: 1, 32>}, {pipeline_mode = #tpu.pipeline_mode<synchronous>, transform_indices = @transform_3, window_bounds = array<i64: 1, 32>}, {pipeline_mode = #tpu.pipeline_mode<synchronous>, transform_indices = @transform_4, window_bounds = array<i64: 32, 32>}, {pipeline_mode = #tpu.pipeline_mode<synchronous>, transform_indices = @transform_5, window_bounds = array<i64: 1, 32>}, {pipeline_mode = #tpu.pipeline_mode<synchronous>, transform_indices = @transform_6, window_bounds = array<i64: 32, 32>}, {pipeline_mode = #tpu.pipeline_mode<synchronous>, transform_indices = @transform_7, window_bounds = array<i64: 1, 32>}, {pipeline_mode = #tpu.pipeline_mode<synchronous>, transform_indices = @transform_8, window_bounds = array<i64: 32, 32>}, {pipeline_mode = #tpu.pipeline_mode<synchronous>, transform_indices = @transform_9, window_bounds = array<i64: 1, 32>}, {pipeline_mode = #tpu.pipeline_mode<synchronous>, transform_indices = @transform_10, window_bounds = array<i64: 32, 32>}, {pipeline_mode = #tpu.pipeline_mode<synchronous>, transform_indices = @transform_11, window_bounds = array<i64: 1, 32>}, {pipeline_mode = #tpu.pipeline_mode<synchronous>, transform_indices = @transform_12, window_bounds = array<i64: 1, 32>}, {pipeline_mode = #tpu.pipeline_mode<synchronous>, transform_indices = @transform_13, window_bounds = array<i64: 1, 32>}, {pipeline_mode = #tpu.pipeline_mode<synchronous>, transform_indices = @transform_14, window_bounds = array<i64: 32, 128>}, {pipeline_mode = #tpu.pipeline_mode<synchronous>, transform_indices = @transform_15, window_bounds = array<i64: 1, 128>}, {pipeline_mode = #tpu.pipeline_mode<synchronous>, transform_indices = @transform_16, window_bounds = array<i64: 128, 32>}, {pipeline_mode = #tpu.pipeline_mode<synchronous>, transform_indices = @transform_17, window_bounds = array<i64: 1, 32>}, {transform_indices = @transform_18, window_bounds = array<i64: 1, 8, 32>}]} {
    %c0 = arith.constant 0 : index
    %c0_0 = arith.constant 0 : index
    %0 = vector.load %arg4[%c0, %c0_0] : memref<1x32xf32, #tpu.memory_space<vmem>>, vector<1x32xf32>
    %1 = vector.shape_cast %0 : vector<1x32xf32> to vector<32xf32>
    %c0_1 = arith.constant 0 : index
    %c0_2 = arith.constant 0 : index
    %2 = vector.load %arg5[%c0_1, %c0_2] : memref<1x32xf32, #tpu.memory_space<vmem>>, vector<1x32xf32>
    %3 = vector.shape_cast %2 : vector<1x32xf32> to vector<32xf32>
    %c0_i32 = arith.constant 0 : i32
    %4 = arith.cmpi eq, %arg1, %c0_i32 : i32
    %5 = arith.extui %4 : i1 to i32
    %c0_i32_3 = arith.constant 0 : i32
    %6 = arith.cmpi ne, %5, %c0_i32_3 : i32
    scf.if %6 {
      %c0_62 = arith.constant 0 : index
      %c0_63 = arith.constant 0 : index
      %c0_64 = arith.constant 0 : index
      %165 = vector.load %arg2[%c0_62, %c0_63, %c0_64] : memref<1x8x32xf32, #tpu.memory_space<vmem>>, vector<1x8x32xf32>
      %166 = vector.shape_cast %165 : vector<1x8x32xf32> to vector<8x32xf32>
      %cst_65 = arith.constant dense<0.000000e+00> : vector<8xf32>
      %167 = vector.multi_reduction <add>, %166, %cst_65 [1] : vector<8x32xf32> to vector<8xf32>
      %168 = vector.shape_cast %167 : vector<8xf32> to vector<8x1xf32>
      %cst_66 = arith.constant 3.200000e+01 : f32
      %169 = vector.broadcast %cst_66 : f32 to vector<8x1xf32>
      %170 = arith.divf %168, %169 : vector<8x1xf32>
      %171 = vector.broadcast %170 : vector<8x1xf32> to vector<8x32xf32>
      %172 = arith.subf %166, %171 : vector<8x32xf32>
      %173 = arith.mulf %172, %172 : vector<8x32xf32>
      %cst_67 = arith.constant dense<0.000000e+00> : vector<8xf32>
      %174 = vector.multi_reduction <add>, %173, %cst_67 [1] : vector<8x32xf32> to vector<8xf32>
      %175 = vector.shape_cast %174 : vector<8xf32> to vector<8x1xf32>
      %cst_68 = arith.constant 3.200000e+01 : f32
      %176 = vector.broadcast %cst_68 : f32 to vector<8x1xf32>
      %177 = arith.divf %175, %176 : vector<8x1xf32>
      %178 = vector.broadcast %170 : vector<8x1xf32> to vector<8x32xf32>
      %179 = arith.subf %166, %178 : vector<8x32xf32>
      %cst_69 = arith.constant 9.99999974E-6 : f32
      %180 = vector.broadcast %cst_69 : f32 to vector<8x1xf32>
      %181 = arith.addf %177, %180 : vector<8x1xf32>
      %182 = math.rsqrt %181 : vector<8x1xf32>
      %183 = vector.broadcast %182 : vector<8x1xf32> to vector<8x32xf32>
      %184 = arith.mulf %179, %183 : vector<8x32xf32>
      %185 = vector.shape_cast %1 : vector<32xf32> to vector<1x32xf32>
      %186 = vector.broadcast %185 : vector<1x32xf32> to vector<8x32xf32>
      %187 = arith.mulf %184, %186 : vector<8x32xf32>
      %188 = vector.shape_cast %3 : vector<32xf32> to vector<1x32xf32>
      %189 = vector.broadcast %188 : vector<1x32xf32> to vector<8x32xf32>
      %190 = arith.addf %187, %189 : vector<8x32xf32>
      %191 = arith.truncf %190 : vector<8x32xf32> to vector<8x32xbf16>
      %c0_70 = arith.constant 0 : index
      %c0_71 = arith.constant 0 : index
      %192 = vector.load %arg8[%c0_70, %c0_71] : memref<32x32xbf16, #tpu.memory_space<vmem>>, vector<32x32xbf16>
      %cst_72 = arith.constant dense<0.000000e+00> : vector<8x32xf32>
      %193 = tpu.matmul %191, %192, %cst_72 {dimension_numbers = #tpu.dot_dimension_numbers<[1], [0], [0], [1], [0, 0, 1, 1], [], []>} : vector<8x32xbf16>, vector<32x32xbf16>, vector<8x32xf32> -> vector<8x32xf32>
      %c0_73 = arith.constant 0 : index
      %c0_74 = arith.constant 0 : index
      %194 = vector.load %arg9[%c0_73, %c0_74] : memref<1x32xf32, #tpu.memory_space<vmem>>, vector<1x32xf32>
      %195 = vector.shape_cast %194 : vector<1x32xf32> to vector<32xf32>
      %196 = vector.shape_cast %195 : vector<32xf32> to vector<1x32xf32>
      %197 = vector.broadcast %196 : vector<1x32xf32> to vector<8x32xf32>
      %198 = arith.addf %193, %197 : vector<8x32xf32>
      %c0_75 = arith.constant 0 : index
      %c0_76 = arith.constant 0 : index
      %199 = vector.load %arg10[%c0_75, %c0_76] : memref<32x32xbf16, #tpu.memory_space<vmem>>, vector<32x32xbf16>
      %cst_77 = arith.constant dense<0.000000e+00> : vector<8x32xf32>
      %200 = tpu.matmul %191, %199, %cst_77 {dimension_numbers = #tpu.dot_dimension_numbers<[1], [0], [0], [1], [0, 0, 1, 1], [], []>} : vector<8x32xbf16>, vector<32x32xbf16>, vector<8x32xf32> -> vector<8x32xf32>
      %c0_78 = arith.constant 0 : index
      %c0_79 = arith.constant 0 : index
      %201 = vector.load %arg11[%c0_78, %c0_79] : memref<1x32xf32, #tpu.memory_space<vmem>>, vector<1x32xf32>
      %202 = vector.shape_cast %201 : vector<1x32xf32> to vector<32xf32>
      %203 = vector.shape_cast %202 : vector<32xf32> to vector<1x32xf32>
      %204 = vector.broadcast %203 : vector<1x32xf32> to vector<8x32xf32>
      %205 = arith.addf %200, %204 : vector<8x32xf32>
      %206 = vector.extract_strided_slice %198 {offsets = [0, 0], sizes = [8, 8], strides = [1, 1]} : vector<8x32xf32> to vector<8x8xf32>
      %207 = arith.truncf %206 : vector<8x8xf32> to vector<8x8xbf16>
      %c0_80 = arith.constant 0 : index
      %c0_81 = arith.constant 0 : index
      %c0_82 = arith.constant 0 : index
      %208 = vector.load %arg21[%c0_80, %c0_81, %c0_82] : memref<4x8x8xbf16, #tpu.memory_space<vmem>>, vector<1x8x8xbf16>
      %209 = vector.shape_cast %208 : vector<1x8x8xbf16> to vector<8x8xbf16>
      %210 = vector.shape_cast %207 : vector<8x8xbf16> to vector<1x8x8xbf16>
      tpu.vector_store %arg21[%c0_80, %c0_81, %c0_82], %210 {strides = array<i32>} : memref<4x8x8xbf16, #tpu.memory_space<vmem>>, vector<1x8x8xbf16>,
      %211 = vector.extract_strided_slice %205 {offsets = [0, 0], sizes = [8, 8], strides = [1, 1]} : vector<8x32xf32> to vector<8x8xf32>
      %212 = arith.truncf %211 : vector<8x8xf32> to vector<8x8xbf16>
      %c0_83 = arith.constant 0 : index
      %c0_84 = arith.constant 0 : index
      %c0_85 = arith.constant 0 : index
      %213 = vector.load %arg22[%c0_83, %c0_84, %c0_85] : memref<4x8x8xbf16, #tpu.memory_space<vmem>>, vector<1x8x8xbf16>
      %214 = vector.shape_cast %213 : vector<1x8x8xbf16> to vector<8x8xbf16>
      %215 = vector.shape_cast %212 : vector<8x8xbf16> to vector<1x8x8xbf16>
      tpu.vector_store %arg22[%c0_83, %c0_84, %c0_85], %215 {strides = array<i32>} : memref<4x8x8xbf16, #tpu.memory_space<vmem>>, vector<1x8x8xbf16>,
      %216 = vector.extract_strided_slice %198 {offsets = [0, 8], sizes = [8, 8], strides = [1, 1]} : vector<8x32xf32> to vector<8x8xf32>
      %217 = arith.truncf %216 : vector<8x8xf32> to vector<8x8xbf16>
      %c1 = arith.constant 1 : index
      %c0_86 = arith.constant 0 : index
      %c0_87 = arith.constant 0 : index
      %218 = vector.load %arg21[%c1, %c0_86, %c0_87] : memref<4x8x8xbf16, #tpu.memory_space<vmem>>, vector<1x8x8xbf16>
      %219 = vector.shape_cast %218 : vector<1x8x8xbf16> to vector<8x8xbf16>
      %220 = vector.shape_cast %217 : vector<8x8xbf16> to vector<1x8x8xbf16>
      tpu.vector_store %arg21[%c1, %c0_86, %c0_87], %220 {strides = array<i32>} : memref<4x8x8xbf16, #tpu.memory_space<vmem>>, vector<1x8x8xbf16>,
      %221 = vector.extract_strided_slice %205 {offsets = [0, 8], sizes = [8, 8], strides = [1, 1]} : vector<8x32xf32> to vector<8x8xf32>
      %222 = arith.truncf %221 : vector<8x8xf32> to vector<8x8xbf16>
      %c1_88 = arith.constant 1 : index
      %c0_89 = arith.constant 0 : index
      %c0_90 = arith.constant 0 : index
      %223 = vector.load %arg22[%c1_88, %c0_89, %c0_90] : memref<4x8x8xbf16, #tpu.memory_space<vmem>>, vector<1x8x8xbf16>
      %224 = vector.shape_cast %223 : vector<1x8x8xbf16> to vector<8x8xbf16>
      %225 = vector.shape_cast %222 : vector<8x8xbf16> to vector<1x8x8xbf16>
      tpu.vector_store %arg22[%c1_88, %c0_89, %c0_90], %225 {strides = array<i32>} : memref<4x8x8xbf16, #tpu.memory_space<vmem>>, vector<1x8x8xbf16>,
      %226 = vector.extract_strided_slice %198 {offsets = [0, 16], sizes = [8, 8], strides = [1, 1]} : vector<8x32xf32> to vector<8x8xf32>
      %227 = arith.truncf %226 : vector<8x8xf32> to vector<8x8xbf16>
      %c2 = arith.constant 2 : index
      %c0_91 = arith.constant 0 : index
      %c0_92 = arith.constant 0 : index
      %228 = vector.load %arg21[%c2, %c0_91, %c0_92] : memref<4x8x8xbf16, #tpu.memory_space<vmem>>, vector<1x8x8xbf16>
      %229 = vector.shape_cast %228 : vector<1x8x8xbf16> to vector<8x8xbf16>
      %230 = vector.shape_cast %227 : vector<8x8xbf16> to vector<1x8x8xbf16>
      tpu.vector_store %arg21[%c2, %c0_91, %c0_92], %230 {strides = array<i32>} : memref<4x8x8xbf16, #tpu.memory_space<vmem>>, vector<1x8x8xbf16>,
      %231 = vector.extract_strided_slice %205 {offsets = [0, 16], sizes = [8, 8], strides = [1, 1]} : vector<8x32xf32> to vector<8x8xf32>
      %232 = arith.truncf %231 : vector<8x8xf32> to vector<8x8xbf16>
      %c2_93 = arith.constant 2 : index
      %c0_94 = arith.constant 0 : index
      %c0_95 = arith.constant 0 : index
      %233 = vector.load %arg22[%c2_93, %c0_94, %c0_95] : memref<4x8x8xbf16, #tpu.memory_space<vmem>>, vector<1x8x8xbf16>
      %234 = vector.shape_cast %233 : vector<1x8x8xbf16> to vector<8x8xbf16>
      %235 = vector.shape_cast %232 : vector<8x8xbf16> to vector<1x8x8xbf16>
      tpu.vector_store %arg22[%c2_93, %c0_94, %c0_95], %235 {strides = array<i32>} : memref<4x8x8xbf16, #tpu.memory_space<vmem>>, vector<1x8x8xbf16>,
      %236 = vector.extract_strided_slice %198 {offsets = [0, 24], sizes = [8, 8], strides = [1, 1]} : vector<8x32xf32> to vector<8x8xf32>
      %237 = arith.truncf %236 : vector<8x8xf32> to vector<8x8xbf16>
      %c3 = arith.constant 3 : index
      %c0_96 = arith.constant 0 : index
      %c0_97 = arith.constant 0 : index
      %238 = vector.load %arg21[%c3, %c0_96, %c0_97] : memref<4x8x8xbf16, #tpu.memory_space<vmem>>, vector<1x8x8xbf16>
      %239 = vector.shape_cast %238 : vector<1x8x8xbf16> to vector<8x8xbf16>
      %240 = vector.shape_cast %237 : vector<8x8xbf16> to vector<1x8x8xbf16>
      tpu.vector_store %arg21[%c3, %c0_96, %c0_97], %240 {strides = array<i32>} : memref<4x8x8xbf16, #tpu.memory_space<vmem>>, vector<1x8x8xbf16>,
      %241 = vector.extract_strided_slice %205 {offsets = [0, 24], sizes = [8, 8], strides = [1, 1]} : vector<8x32xf32> to vector<8x8xf32>
      %242 = arith.truncf %241 : vector<8x8xf32> to vector<8x8xbf16>
      %c3_98 = arith.constant 3 : index
      %c0_99 = arith.constant 0 : index
      %c0_100 = arith.constant 0 : index
      %243 = vector.load %arg22[%c3_98, %c0_99, %c0_100] : memref<4x8x8xbf16, #tpu.memory_space<vmem>>, vector<1x8x8xbf16>
      %244 = vector.shape_cast %243 : vector<1x8x8xbf16> to vector<8x8xbf16>
      %245 = vector.shape_cast %242 : vector<8x8xbf16> to vector<1x8x8xbf16>
      tpu.vector_store %arg22[%c3_98, %c0_99, %c0_100], %245 {strides = array<i32>} : memref<4x8x8xbf16, #tpu.memory_space<vmem>>, vector<1x8x8xbf16>,
    } else {
    }
    %c8_i32 = arith.constant 8 : i32
    %7 = arith.muli %arg1, %c8_i32 : i32
    %8 = tpu.assume_multiple %7, 8 : i32
    %c0_4 = arith.constant 0 : index
    %9 = arith.index_cast %8 : i32 to index
    %c0_5 = arith.constant 0 : index
    %10 = vector.load %arg2[%c0_4, %9, %c0_5] : memref<1x8x32xf32, #tpu.memory_space<vmem>>, vector<1x8x32xf32>
    %11 = vector.shape_cast %10 : vector<1x8x32xf32> to vector<8x32xf32>
    %cst = arith.constant dense<0.000000e+00> : vector<8xf32>
    %12 = vector.multi_reduction <add>, %11, %cst [1] : vector<8x32xf32> to vector<8xf32>
    %13 = vector.shape_cast %12 : vector<8xf32> to vector<8x1xf32>
    %cst_6 = arith.constant 3.200000e+01 : f32
    %14 = vector.broadcast %cst_6 : f32 to vector<8x1xf32>
    %15 = arith.divf %13, %14 : vector<8x1xf32>
    %16 = vector.broadcast %15 : vector<8x1xf32> to vector<8x32xf32>
    %17 = arith.subf %11, %16 : vector<8x32xf32>
    %18 = arith.mulf %17, %17 : vector<8x32xf32>
    %cst_7 = arith.constant dense<0.000000e+00> : vector<8xf32>
    %19 = vector.multi_reduction <add>, %18, %cst_7 [1] : vector<8x32xf32> to vector<8xf32>
    %20 = vector.shape_cast %19 : vector<8xf32> to vector<8x1xf32>
    %cst_8 = arith.constant 3.200000e+01 : f32
    %21 = vector.broadcast %cst_8 : f32 to vector<8x1xf32>
    %22 = arith.divf %20, %21 : vector<8x1xf32>
    %23 = vector.broadcast %15 : vector<8x1xf32> to vector<8x32xf32>
    %24 = arith.subf %11, %23 : vector<8x32xf32>
    %cst_9 = arith.constant 9.99999974E-6 : f32
    %25 = vector.broadcast %cst_9 : f32 to vector<8x1xf32>
    %26 = arith.addf %22, %25 : vector<8x1xf32>
    %27 = math.rsqrt %26 : vector<8x1xf32>
    %28 = vector.broadcast %27 : vector<8x1xf32> to vector<8x32xf32>
    %29 = arith.mulf %24, %28 : vector<8x32xf32>
    %30 = vector.shape_cast %1 : vector<32xf32> to vector<1x32xf32>
    %31 = vector.broadcast %30 : vector<1x32xf32> to vector<8x32xf32>
    %32 = arith.mulf %29, %31 : vector<8x32xf32>
    %33 = vector.shape_cast %3 : vector<32xf32> to vector<1x32xf32>
    %34 = vector.broadcast %33 : vector<1x32xf32> to vector<8x32xf32>
    %35 = arith.addf %32, %34 : vector<8x32xf32>
    %36 = arith.truncf %35 : vector<8x32xf32> to vector<8x32xbf16>
    %c0_10 = arith.constant 0 : index
    %c0_11 = arith.constant 0 : index
    %37 = vector.load %arg6[%c0_10, %c0_11] : memref<32x32xbf16, #tpu.memory_space<vmem>>, vector<32x32xbf16>
    %cst_12 = arith.constant dense<0.000000e+00> : vector<8x32xf32>
    %38 = tpu.matmul %36, %37, %cst_12 {dimension_numbers = #tpu.dot_dimension_numbers<[1], [0], [0], [1], [0, 0, 1, 1], [], []>} : vector<8x32xbf16>, vector<32x32xbf16>, vector<8x32xf32> -> vector<8x32xf32>
    %c0_13 = arith.constant 0 : index
    %c0_14 = arith.constant 0 : index
    %39 = vector.load %arg7[%c0_13, %c0_14] : memref<1x32xf32, #tpu.memory_space<vmem>>, vector<1x32xf32>
    %40 = vector.shape_cast %39 : vector<1x32xf32> to vector<32xf32>
    %41 = vector.shape_cast %40 : vector<32xf32> to vector<1x32xf32>
    %42 = vector.broadcast %41 : vector<1x32xf32> to vector<8x32xf32>
    %43 = arith.addf %38, %42 : vector<8x32xf32>
    %cst_15 = arith.constant 0.353553385 : f32
    %44 = vector.broadcast %cst_15 : f32 to vector<8x32xf32>
    %45 = arith.mulf %43, %44 : vector<8x32xf32>
    %46 = vector.extract_strided_slice %45 {offsets = [0, 0], sizes = [8, 8], strides = [1, 1]} : vector<8x32xf32> to vector<8x8xf32>
    %47 = vector.extract_strided_slice %45 {offsets = [0, 8], sizes = [8, 8], strides = [1, 1]} : vector<8x32xf32> to vector<8x8xf32>
    %48 = vector.extract_strided_slice %45 {offsets = [0, 16], sizes = [8, 8], strides = [1, 1]} : vector<8x32xf32> to vector<8x8xf32>
    %49 = vector.extract_strided_slice %45 {offsets = [0, 24], sizes = [8, 8], strides = [1, 1]} : vector<8x32xf32> to vector<8x8xf32>
    %50 = vector.shape_cast %46 : vector<8x8xf32> to vector<1x8x8xf32>
    %51 = vector.shape_cast %47 : vector<8x8xf32> to vector<1x8x8xf32>
    %52 = vector.shape_cast %48 : vector<8x8xf32> to vector<1x8x8xf32>
    %53 = vector.shape_cast %49 : vector<8x8xf32> to vector<1x8x8xf32>
    %54 = tpu.concatenate %50, %51, %52, %53 in 0 : vector<1x8x8xf32>, vector<1x8x8xf32>, vector<1x8x8xf32>, vector<1x8x8xf32> -> vector<4x8x8xf32>
    %55 = arith.truncf %54 : vector<4x8x8xf32> to vector<4x8x8xbf16>
    %c0_16 = arith.constant 0 : index
    %c0_17 = arith.constant 0 : index
    %c0_18 = arith.constant 0 : index
    %56 = vector.load %arg3[%c0_16, %c0_17, %c0_18] : memref<1x1x8xf32, #tpu.memory_space<vmem>>, vector<1x1x8xf32>
    %57 = vector.shape_cast %56 : vector<1x1x8xf32> to vector<1x8xf32>
    %58 = tpu.iota {dimensions = array<i32: 0>} : vector<8x8xi32>
    %59 = vector.broadcast %8 : i32 to vector<8x8xi32>
    %60 = arith.addi %59, %58 : vector<8x8xi32>
    %61 = tpu.iota {dimensions = array<i32: 1>} : vector<8x8xi32>
    %62 = arith.cmpi sle, %61, %60 : vector<8x8xi32>
    %cst_19 = arith.constant 0.000000e+00 : f32
    %cst_20 = arith.constant -1.000000e+09 : f32
    %63 = vector.broadcast %cst_19 : f32 to vector<8x8xf32>
    %64 = vector.broadcast %cst_20 : f32 to vector<8x8xf32>
    %65 = arith.select %62, %63, %64 : vector<8x8xi1>, vector<8x8xf32>
    %66 = vector.broadcast %57 : vector<1x8xf32> to vector<8x8xf32>
    %67 = arith.addf %65, %66 : vector<8x8xf32>
    %c0_21 = arith.constant 0 : index
    %c0_22 = arith.constant 0 : index
    %c0_23 = arith.constant 0 : index
    %68 = vector.load %arg21[%c0_21, %c0_22, %c0_23] : memref<4x8x8xbf16, #tpu.memory_space<vmem>>, vector<4x8x8xbf16>
    "tpu.trace_start"() <{level = 10 : i32, message = "hqd,hkd->hqk"}> : () -> ()
    %cst_24 = arith.constant dense<0.000000e+00> : vector<4x8x8xf32>
    %69 = tpu.matmul %55, %68, %cst_24 {dimension_numbers = #tpu.dot_dimension_numbers<[2], [2], [1], [1], [0, 0, 0, 1, 1, 1], [0], [0]>} : vector<4x8x8xbf16>, vector<4x8x8xbf16>, vector<4x8x8xf32> -> vector<4x8x8xf32>
    "tpu.trace_stop"() : () -> ()
    %70 = vector.shape_cast %67 : vector<8x8xf32> to vector<1x8x8xf32>
    %71 = vector.broadcast %70 : vector<1x8x8xf32> to vector<4x8x8xf32>
    %72 = arith.addf %69, %71 : vector<4x8x8xf32>
    %cst_25 = arith.constant dense<0xFF800000> : vector<4x8xf32>
    %73 = vector.multi_reduction <maximumf>, %72, %cst_25 [2] : vector<4x8x8xf32> to vector<4x8xf32>
    %74 = vector.shape_cast %73 : vector<4x8xf32> to vector<4x8x1xf32>
    %75 = vector.broadcast %74 : vector<4x8x1xf32> to vector<4x8x8xf32>
    %76 = arith.subf %72, %75 : vector<4x8x8xf32>
    %77 = math.exp %76 : vector<4x8x8xf32>
    %cst_26 = arith.constant dense<0.000000e+00> : vector<4x8xf32>
    %78 = vector.multi_reduction <add>, %77, %cst_26 [2] : vector<4x8x8xf32> to vector<4x8xf32>
    %79 = vector.shape_cast %78 : vector<4x8xf32> to vector<4x8x1xf32>
    %80 = arith.truncf %77 : vector<4x8x8xf32> to vector<4x8x8xbf16>
    %c0_27 = arith.constant 0 : index
    %c0_28 = arith.constant 0 : index
    %c0_29 = arith.constant 0 : index
    %81 = vector.load %arg22[%c0_27, %c0_28, %c0_29] : memref<4x8x8xbf16, #tpu.memory_space<vmem>>, vector<4x8x8xbf16>
    "tpu.trace_start"() <{level = 10 : i32, message = "hqk,hkd->hqd"}> : () -> ()
    %cst_30 = arith.constant dense<0.000000e+00> : vector<4x8x8xf32>
    %82 = tpu.matmul %80, %81, %cst_30 {dimension_numbers = #tpu.dot_dimension_numbers<[2], [1], [1], [2], [0, 0, 0, 1, 1, 2], [0], [0]>} : vector<4x8x8xbf16>, vector<4x8x8xbf16>, vector<4x8x8xf32> -> vector<4x8x8xf32>
    "tpu.trace_stop"() : () -> ()
    %83 = tpu.reciprocal %79 {approx = true} : vector<4x8x1xf32> -> vector<4x8x1xf32>
    %84 = vector.broadcast %83 : vector<4x8x1xf32> to vector<4x8x8xf32>
    %85 = arith.mulf %82, %84 : vector<4x8x8xf32>
    %86 = vector.extract_strided_slice %85 {offsets = [0, 0, 0], sizes = [1, 8, 8], strides = [1, 1, 1]} : vector<4x8x8xf32> to vector<1x8x8xf32>
    %87 = vector.shape_cast %86 : vector<1x8x8xf32> to vector<8x8xf32>
    %88 = vector.extract_strided_slice %85 {offsets = [1, 0, 0], sizes = [1, 8, 8], strides = [1, 1, 1]} : vector<4x8x8xf32> to vector<1x8x8xf32>
    %89 = vector.shape_cast %88 : vector<1x8x8xf32> to vector<8x8xf32>
    %90 = vector.extract_strided_slice %85 {offsets = [2, 0, 0], sizes = [1, 8, 8], strides = [1, 1, 1]} : vector<4x8x8xf32> to vector<1x8x8xf32>
    %91 = vector.shape_cast %90 : vector<1x8x8xf32> to vector<8x8xf32>
    %92 = vector.extract_strided_slice %85 {offsets = [3, 0, 0], sizes = [1, 8, 8], strides = [1, 1, 1]} : vector<4x8x8xf32> to vector<1x8x8xf32>
    %93 = vector.shape_cast %92 : vector<1x8x8xf32> to vector<8x8xf32>
    %94 = tpu.concatenate %87, %89, %91, %93 in 1 : vector<8x8xf32>, vector<8x8xf32>, vector<8x8xf32>, vector<8x8xf32> -> vector<8x32xf32>
    %95 = arith.truncf %94 : vector<8x32xf32> to vector<8x32xbf16>
    %c0_31 = arith.constant 0 : index
    %c0_32 = arith.constant 0 : index
    %96 = vector.load %arg12[%c0_31, %c0_32] : memref<32x32xbf16, #tpu.memory_space<vmem>>, vector<32x32xbf16>
    %cst_33 = arith.constant dense<0.000000e+00> : vector<8x32xf32>
    %97 = tpu.matmul %95, %96, %cst_33 {dimension_numbers = #tpu.dot_dimension_numbers<[1], [0], [0], [1], [0, 0, 1, 1], [], []>} : vector<8x32xbf16>, vector<32x32xbf16>, vector<8x32xf32> -> vector<8x32xf32>
    %c0_34 = arith.constant 0 : index
    %c0_35 = arith.constant 0 : index
    %98 = vector.load %arg13[%c0_34, %c0_35] : memref<1x32xf32, #tpu.memory_space<vmem>>, vector<1x32xf32>
    %99 = vector.shape_cast %98 : vector<1x32xf32> to vector<32xf32>
    %100 = vector.shape_cast %99 : vector<32xf32> to vector<1x32xf32>
    %101 = vector.broadcast %100 : vector<1x32xf32> to vector<8x32xf32>
    %102 = arith.addf %97, %101 : vector<8x32xf32>
    %103 = arith.addf %11, %102 : vector<8x32xf32>
    %c0_36 = arith.constant 0 : index
    %c0_37 = arith.constant 0 : index
    %104 = vector.load %arg14[%c0_36, %c0_37] : memref<1x32xf32, #tpu.memory_space<vmem>>, vector<1x32xf32>
    %105 = vector.shape_cast %104 : vector<1x32xf32> to vector<32xf32>
    %c0_38 = arith.constant 0 : index
    %c0_39 = arith.constant 0 : index
    %106 = vector.load %arg15[%c0_38, %c0_39] : memref<1x32xf32, #tpu.memory_space<vmem>>, vector<1x32xf32>
    %107 = vector.shape_cast %106 : vector<1x32xf32> to vector<32xf32>
    %cst_40 = arith.constant dense<0.000000e+00> : vector<8xf32>
    %108 = vector.multi_reduction <add>, %103, %cst_40 [1] : vector<8x32xf32> to vector<8xf32>
    %109 = vector.shape_cast %108 : vector<8xf32> to vector<8x1xf32>
    %cst_41 = arith.constant 3.200000e+01 : f32
    %110 = vector.broadcast %cst_41 : f32 to vector<8x1xf32>
    %111 = arith.divf %109, %110 : vector<8x1xf32>
    %112 = vector.broadcast %111 : vector<8x1xf32> to vector<8x32xf32>
    %113 = arith.subf %103, %112 : vector<8x32xf32>
    %114 = arith.mulf %113, %113 : vector<8x32xf32>
    %cst_42 = arith.constant dense<0.000000e+00> : vector<8xf32>
    %115 = vector.multi_reduction <add>, %114, %cst_42 [1] : vector<8x32xf32> to vector<8xf32>
    %116 = vector.shape_cast %115 : vector<8xf32> to vector<8x1xf32>
    %cst_43 = arith.constant 3.200000e+01 : f32
    %117 = vector.broadcast %cst_43 : f32 to vector<8x1xf32>
    %118 = arith.divf %116, %117 : vector<8x1xf32>
    %119 = vector.broadcast %111 : vector<8x1xf32> to vector<8x32xf32>
    %120 = arith.subf %103, %119 : vector<8x32xf32>
    %cst_44 = arith.constant 9.99999974E-6 : f32
    %121 = vector.broadcast %cst_44 : f32 to vector<8x1xf32>
    %122 = arith.addf %118, %121 : vector<8x1xf32>
    %123 = math.rsqrt %122 : vector<8x1xf32>
    %124 = vector.broadcast %123 : vector<8x1xf32> to vector<8x32xf32>
    %125 = arith.mulf %120, %124 : vector<8x32xf32>
    %126 = vector.shape_cast %105 : vector<32xf32> to vector<1x32xf32>
    %127 = vector.broadcast %126 : vector<1x32xf32> to vector<8x32xf32>
    %128 = arith.mulf %125, %127 : vector<8x32xf32>
    %129 = vector.shape_cast %107 : vector<32xf32> to vector<1x32xf32>
    %130 = vector.broadcast %129 : vector<1x32xf32> to vector<8x32xf32>
    %131 = arith.addf %128, %130 : vector<8x32xf32>
    %132 = arith.truncf %131 : vector<8x32xf32> to vector<8x32xbf16>
    %c0_45 = arith.constant 0 : index
    %c0_46 = arith.constant 0 : index
    %133 = vector.load %arg16[%c0_45, %c0_46] : memref<32x128xbf16, #tpu.memory_space<vmem>>, vector<32x128xbf16>
    %cst_47 = arith.constant dense<0.000000e+00> : vector<8x128xf32>
    %134 = tpu.matmul %132, %133, %cst_47 {dimension_numbers = #tpu.dot_dimension_numbers<[1], [0], [0], [1], [0, 0, 1, 1], [], []>} : vector<8x32xbf16>, vector<32x128xbf16>, vector<8x128xf32> -> vector<8x128xf32>
    %c0_48 = arith.constant 0 : index
    %c0_49 = arith.constant 0 : index
    %135 = vector.load %arg17[%c0_48, %c0_49] : memref<1x128xf32, #tpu.memory_space<vmem>>, vector<1x128xf32>
    %136 = vector.shape_cast %135 : vector<1x128xf32> to vector<128xf32>
    %137 = vector.shape_cast %136 : vector<128xf32> to vector<1x128xf32>
    %138 = vector.broadcast %137 : vector<1x128xf32> to vector<8x128xf32>
    %139 = arith.addf %134, %138 : vector<8x128xf32>
    %cst_50 = arith.constant 5.000000e-01 : f32
    %140 = vector.broadcast %cst_50 : f32 to vector<8x128xf32>
    %141 = arith.mulf %140, %139 : vector<8x128xf32>
    %cst_51 = arith.constant 4.471500e-02 : f32
    %142 = vector.broadcast %cst_51 : f32 to vector<8x128xf32>
    %143 = arith.mulf %142, %139 : vector<8x128xf32>
    %144 = arith.mulf %143, %139 : vector<8x128xf32>
    %145 = arith.mulf %144, %139 : vector<8x128xf32>
    %146 = arith.addf %139, %145 : vector<8x128xf32>
    %cst_52 = arith.constant 0.797884583 : f32
    %147 = vector.broadcast %cst_52 : f32 to vector<8x128xf32>
    %148 = arith.mulf %147, %146 : vector<8x128xf32>
    %149 = math.tanh %148 : vector<8x128xf32>
    %cst_53 = arith.constant 1.000000e+00 : f32
    %150 = vector.broadcast %cst_53 : f32 to vector<8x128xf32>
    %151 = arith.addf %150, %149 : vector<8x128xf32>
    %152 = arith.mulf %141, %151 : vector<8x128xf32>
    %153 = arith.truncf %152 : vector<8x128xf32> to vector<8x128xbf16>
    %c0_54 = arith.constant 0 : index
    %c0_55 = arith.constant 0 : index
    %154 = vector.load %arg18[%c0_54, %c0_55] : memref<128x32xbf16, #tpu.memory_space<vmem>>, vector<128x32xbf16>
    %cst_56 = arith.constant dense<0.000000e+00> : vector<8x32xf32>
    %155 = tpu.matmul %153, %154, %cst_56 {dimension_numbers = #tpu.dot_dimension_numbers<[1], [0], [0], [1], [0, 0, 1, 1], [], []>} : vector<8x128xbf16>, vector<128x32xbf16>, vector<8x32xf32> -> vector<8x32xf32>
    %c0_57 = arith.constant 0 : index
    %c0_58 = arith.constant 0 : index
    %156 = vector.load %arg19[%c0_57, %c0_58] : memref<1x32xf32, #tpu.memory_space<vmem>>, vector<1x32xf32>
    %157 = vector.shape_cast %156 : vector<1x32xf32> to vector<32xf32>
    %158 = vector.shape_cast %157 : vector<32xf32> to vector<1x32xf32>
    %159 = vector.broadcast %158 : vector<1x32xf32> to vector<8x32xf32>
    %160 = arith.addf %155, %159 : vector<8x32xf32>
    %161 = arith.addf %103, %160 : vector<8x32xf32>
    %c0_59 = arith.constant 0 : index
    %c0_60 = arith.constant 0 : index
    %c0_61 = arith.constant 0 : index
    %162 = vector.load %arg20[%c0_59, %c0_60, %c0_61] : memref<1x8x32xf32, #tpu.memory_space<vmem>>, vector<1x8x32xf32>
    %163 = vector.shape_cast %162 : vector<1x8x32xf32> to vector<8x32xf32>
    %164 = vector.shape_cast %161 : vector<8x32xf32> to vector<1x8x32xf32>
    tpu.vector_store %arg20[%c0_59, %c0_60, %c0_61], %164 {strides = array<i32>} : memref<1x8x32xf32, #tpu.memory_space<vmem>>, vector<1x8x32xf32>,
    return
  }
  func.func @transform_0(%arg0: i32, %arg1: i32) -> (i32, i32, i32) {
    %c0_i32 = arith.constant 0 : i32
    %c0_i32_0 = arith.constant 0 : i32
    %c0_i32_1 = arith.constant 0 : i32
    return %arg0, %c0_i32, %c0_i32_0 : i32, i32, i32
  }
  func.func @transform_1(%arg0: i32, %arg1: i32) -> (i32, i32, i32) {
    %c0_i32 = arith.constant 0 : i32
    %c0_i32_0 = arith.constant 0 : i32
    %c0_i32_1 = arith.constant 0 : i32
    return %arg0, %c0_i32, %c0_i32_0 : i32, i32, i32
  }
  func.func @transform_2(%arg0: i32, %arg1: i32) -> (i32, i32) {
    %c0_i32 = arith.constant 0 : i32
    %c0_i32_0 = arith.constant 0 : i32
    %c0_i32_1 = arith.constant 0 : i32
    return %c0_i32, %c0_i32_0 : i32, i32
  }
  func.func @transform_3(%arg0: i32, %arg1: i32) -> (i32, i32) {
    %c0_i32 = arith.constant 0 : i32
    %c0_i32_0 = arith.constant 0 : i32
    %c0_i32_1 = arith.constant 0 : i32
    return %c0_i32, %c0_i32_0 : i32, i32
  }
  func.func @transform_4(%arg0: i32, %arg1: i32) -> (i32, i32) {
    %c0_i32 = arith.constant 0 : i32
    %c0_i32_0 = arith.constant 0 : i32
    %c0_i32_1 = arith.constant 0 : i32
    return %c0_i32, %c0_i32_0 : i32, i32
  }
  func.func @transform_5(%arg0: i32, %arg1: i32) -> (i32, i32) {
    %c0_i32 = arith.constant 0 : i32
    %c0_i32_0 = arith.constant 0 : i32
    %c0_i32_1 = arith.constant 0 : i32
    return %c0_i32, %c0_i32_0 : i32, i32
  }
  func.func @transform_6(%arg0: i32, %arg1: i32) -> (i32, i32) {
    %c0_i32 = arith.constant 0 : i32
    %c0_i32_0 = arith.constant 0 : i32
    %c0_i32_1 = arith.constant 0 : i32
    return %c0_i32, %c0_i32_0 : i32, i32
  }
  func.func @transform_7(%arg0: i32, %arg1: i32) -> (i32, i32) {
    %c0_i32 = arith.constant 0 : i32
    %c0_i32_0 = arith.constant 0 : i32
    %c0_i32_1 = arith.constant 0 : i32
    return %c0_i32, %c0_i32_0 : i32, i32
  }
  func.func @transform_8(%arg0: i32, %arg1: i32) -> (i32, i32) {
    %c0_i32 = arith.constant 0 : i32
    %c0_i32_0 = arith.constant 0 : i32
    %c0_i32_1 = arith.constant 0 : i32
    return %c0_i32, %c0_i32_0 : i32, i32
  }
  func.func @transform_9(%arg0: i32, %arg1: i32) -> (i32, i32) {
    %c0_i32 = arith.constant 0 : i32
    %c0_i32_0 = arith.constant 0 : i32
    %c0_i32_1 = arith.constant 0 : i32
    return %c0_i32, %c0_i32_0 : i32, i32
  }
  func.func @transform_10(%arg0: i32, %arg1: i32) -> (i32, i32) {
    %c0_i32 = arith.constant 0 : i32
    %c0_i32_0 = arith.constant 0 : i32
    %c0_i32_1 = arith.constant 0 : i32
    return %c0_i32, %c0_i32_0 : i32, i32
  }
  func.func @transform_11(%arg0: i32, %arg1: i32) -> (i32, i32) {
    %c0_i32 = arith.constant 0 : i32
    %c0_i32_0 = arith.constant 0 : i32
    %c0_i32_1 = arith.constant 0 : i32
    return %c0_i32, %c0_i32_0 : i32, i32
  }
  func.func @transform_12(%arg0: i32, %arg1: i32) -> (i32, i32) {
    %c0_i32 = arith.constant 0 : i32
    %c0_i32_0 = arith.constant 0 : i32
    %c0_i32_1 = arith.constant 0 : i32
    return %c0_i32, %c0_i32_0 : i32, i32
  }
  func.func @transform_13(%arg0: i32, %arg1: i32) -> (i32, i32) {
    %c0_i32 = arith.constant 0 : i32
    %c0_i32_0 = arith.constant 0 : i32
    %c0_i32_1 = arith.constant 0 : i32
    return %c0_i32, %c0_i32_0 : i32, i32
  }
  func.func @transform_14(%arg0: i32, %arg1: i32) -> (i32, i32) {
    %c0_i32 = arith.constant 0 : i32
    %c0_i32_0 = arith.constant 0 : i32
    %c0_i32_1 = arith.constant 0 : i32
    return %c0_i32, %c0_i32_0 : i32, i32
  }
  func.func @transform_15(%arg0: i32, %arg1: i32) -> (i32, i32) {
    %c0_i32 = arith.constant 0 : i32
    %c0_i32_0 = arith.constant 0 : i32
    %c0_i32_1 = arith.constant 0 : i32
    return %c0_i32, %c0_i32_0 : i32, i32
  }
  func.func @transform_16(%arg0: i32, %arg1: i32) -> (i32, i32) {
    %c0_i32 = arith.constant 0 : i32
    %c0_i32_0 = arith.constant 0 : i32
    %c0_i32_1 = arith.constant 0 : i32
    return %c0_i32, %c0_i32_0 : i32, i32
  }
  func.func @transform_17(%arg0: i32, %arg1: i32) -> (i32, i32) {
    %c0_i32 = arith.constant 0 : i32
    %c0_i32_0 = arith.constant 0 : i32
    %c0_i32_1 = arith.constant 0 : i32
    return %c0_i32, %c0_i32_0 : i32, i32
  }
  func.func @transform_18(%arg0: i32, %arg1: i32) -> (i32, i32, i32) {
    %c0_i32 = arith.constant 0 : i32
    %c0_i32_0 = arith.constant 0 : i32
    return %arg0, %arg1, %c0_i32 : i32, i32, i32
  }
}

</mosaic_0001>

<llo_original>
// kernel: tpu_custom_call.1
$region0: #{tpu_custom_call.1}
  #allocation0 [shape = 'u32[]', space=smem, size = 0x4, offset = 0x4, fixed_abs, tag = 'smem constant byte address 0x4 - core index']
  #allocation1 [shape = 'u32[72,128]{1,0:T(1,128)}', space=vmem, size = 0x9000, scoped, tag = 'internal scratch']
  #allocation2 [shape = 'bf16[4,8,8]{2,1,0:T(8,128)(2,1)}', space=vmem, size = 0x2000, scoped, tag = 'scratch operand']
  #allocation3 [shape = 'bf16[4,8,8]{2,1,0:T(8,128)(2,1)}', space=vmem, size = 0x2000, scoped, tag = 'scratch operand']
  %s0 = inlined_call_operand.vmem [shape: f32[2,8,32], index: 0, kind: input, shape index: {}]
  %s1 = inlined_call_operand.hbm [shape: f32[2,1,8], index: 1, kind: input, shape index: {}]
  %s2 = inlined_call_operand.vmem [shape: f32[1,32], index: 2, kind: input, shape index: {}]
  %s3 = inlined_call_operand.vmem [shape: f32[1,32], index: 3, kind: input, shape index: {}]
  %s4 = inlined_call_operand.vmem [shape: bf16[32,32], index: 4, kind: input, shape index: {}]
  %s5 = inlined_call_operand.vmem [shape: f32[1,32], index: 5, kind: input, shape index: {}]
  %s6 = inlined_call_operand.vmem [shape: bf16[32,32], index: 6, kind: input, shape index: {}]
  %s7 = inlined_call_operand.vmem [shape: f32[1,32], index: 7, kind: input, shape index: {}]
  %s8 = inlined_call_operand.vmem [shape: bf16[32,32], index: 8, kind: input, shape index: {}]
  %s9 = inlined_call_operand.vmem [shape: f32[1,32], index: 9, kind: input, shape index: {}]
  %s10 = inlined_call_operand.vmem [shape: bf16[32,32], index: 10, kind: input, shape index: {}]
  %s11 = inlined_call_operand.vmem [shape: f32[1,32], index: 11, kind: input, shape index: {}]
  %s12 = inlined_call_operand.vmem [shape: f32[1,32], index: 12, kind: input, shape index: {}]
  %s13 = inlined_call_operand.vmem [shape: f32[1,32], index: 13, kind: input, shape index: {}]
  %s14 = inlined_call_operand.hbm [shape: bf16[32,128], index: 14, kind: input, shape index: {}]
  %s15 = inlined_call_operand.vmem [shape: f32[1,128], index: 15, kind: input, shape index: {}]
  %s16 = inlined_call_operand.vmem [shape: bf16[128,32], index: 16, kind: input, shape index: {}]
  %s17 = inlined_call_operand.vmem [shape: f32[1,32], index: 17, kind: input, shape index: {}]
  %s18 = inlined_call_operand.hbm [shape: f32[2,8,32], index: 18, kind: output, shape index: {}]
  %s19 = sld [smem:[#allocation0]]
  $region117: #{tpu_custom_call.1} parent=0
    _
  %s21 = ssub.s32 1, %s19
  %s22 = scalar_select 0, %s21, %s19
  $region1: #{tpu_custom_call.1} parent=0
    #allocation4 [shape = 'u8[1024]{0}', space=vmem, size = 0x400, scoped, tag = 'input window, operand 1']
    #allocation5 [shape = 's32[2]{0}', space=sflag, size = 0x8, scoped, tag = 'scoped memory for tpu_custom_call.1']
    #allocation6 [shape = 's32[2]{0}', space=sflag, size = 0x8, scoped, tag = 'scoped memory for tpu_custom_call.1']
    #allocation7 [shape = 'u8[8192]{0}', space=vmem, size = 0x2000, scoped, tag = 'input window, operand 14, single buffered']
    #allocation8 [shape = 's32[1]{0}', space=sflag, size = 0x4, scoped, tag = 'scoped memory for tpu_custom_call.1']
    #allocation9 [shape = 'u8[8192]{0}', space=vmem, size = 0x2000, scoped, tag = 'output window, operand 0']
    %23 = vsyncpa [#allocation5], 0
    %s24 = scalar_lea.sflag [#allocation5], 1
    %25 = vsyncpa %s24, 0
    %26 = vsyncpa [#allocation8], 0
    %27 = vsyncpa [#allocation6], 0
    %s28 = scalar_lea.sflag [#allocation6], 1
    %29 = vsyncpa %s28, 0
    loop: start=0, step=1, limit=4
    $region2: #{tpu_custom_call.1} parent=1 // loop_pre_header
      _
    $region3: #{tpu_custom_call.1} parent=1 // loop_header
      %s31 = sphi 0, %s35
      %p32 = scmp.ge.s32.totalorder %s31, 4
      %s38 = sphi 0, %s50
      %s39 = sphi 0, %s46
      %s40 = sphi 0, %s38
      %s41 = sphi 0, %s39
      %s42 = sphi 0, %s40
      %s43 = sphi 0, %s41
      %s53 = sphi 0, %s55
      %s56 = sphi 0, %s53
      %s57 = sphi 0, %s56
      %s73 = sphi 0, %s57
      %s79 = sphi 0, %s81
      %s82 = sphi 0, %s79
      %s83 = sphi 0, %s82
      %s99 = sphi 0, %s83
      %s103 = sphi 0, %s103
      %s105 = sphi 0, %s103
      %s106 = sphi 0, %s105
      %s120 = sphi 0, %s106
      %s124 = sphi 0, %s124
      %s126 = sphi 0, %s124
      %s127 = sphi 0, %s126
      %s141 = sphi 0, %s127
      %s145 = sphi 0, %s145
      %s147 = sphi 0, %s145
      %s148 = sphi 0, %s147
      %s162 = sphi 0, %s148
      %s166 = sphi 0, %s166
      %s168 = sphi 0, %s166
      %s169 = sphi 0, %s168
      %s183 = sphi 0, %s169
      %s187 = sphi 0, %s187
      %s189 = sphi 0, %s187
      %s190 = sphi 0, %s189
      %s204 = sphi 0, %s190
      %s208 = sphi 0, %s208
      %s210 = sphi 0, %s208
      %s211 = sphi 0, %s210
      %s225 = sphi 0, %s211
      %s229 = sphi 0, %s229
      %s231 = sphi 0, %s229
      %s232 = sphi 0, %s231
      %s246 = sphi 0, %s232
      %s250 = sphi 0, %s250
      %s252 = sphi 0, %s250
      %s253 = sphi 0, %s252
      %s267 = sphi 0, %s253
      %s271 = sphi 0, %s271
      %s273 = sphi 0, %s271
      %s274 = sphi 0, %s273
      %s288 = sphi 0, %s274
      %s292 = sphi 0, %s292
      %s294 = sphi 0, %s292
      %s295 = sphi 0, %s294
      %s309 = sphi 0, %s295
      %s313 = sphi 0, %s313
      %s315 = sphi 0, %s313
      %s316 = sphi 0, %s315
      %s330 = sphi 0, %s316
      %s334 = sphi 0, %s334
      %s336 = sphi 0, %s334
      %s337 = sphi 0, %s336
      %s351 = sphi 0, %s337
      %s355 = sphi 0, %s355
      %s357 = sphi 0, %s355
      %s358 = sphi 0, %s357
      %s372 = sphi 0, %s358
      %s376 = sphi 0, %s376
      %s378 = sphi 0, %s376
      %s379 = sphi 0, %s378
      %s393 = sphi 0, %s379
      %s397 = sphi 0, %s397
      %s399 = sphi 0, %s397
      %s400 = sphi 0, %s399
      %s414 = sphi 0, %s400
      %s418 = sphi 0, %s418
      %s420 = sphi 0, %s418
      %s421 = sphi 0, %s420
      %s435 = sphi 0, %s421
      %s443 = sphi 0, %s445
      %s446 = sphi 0, %s443
      %s447 = sphi 0, %s446
      %s463 = sphi 0, %s447
    $region4: #{tpu_custom_call.1} parent=1 // loop_header_branch
      %34 = sbr.rel (%p32) target = $region8
    $region5: #{tpu_custom_call.1} parent=1 // loop_body
      %s36 = ssub.s32 %s31, 1
      %s37 = ssub.s32 %s31, 2
      %s44 = sadd.s32 1, %s39
      %p45 = scmp.ge.s32.totalorder %s44, 1
      %s46 = scalar_select %p45, 0, %s44
      %s47 = sadd.s32 1, %s38
      %s48 = scalar_select %p45, %s47, %s38
      %p49 = scmp.ge.s32.totalorder %s48, 2
      %s50 = scalar_select %p49, 0, %s48
      %s51 = ssub.s32 %s38, %s50
      %p52 = scmp.eq.s32.totalorder %s51, 0
      %s54 = sadd.s32 %s53, 1
      %s55 = scalar_select %p52, %s53, %s54
      %p58 = pneg %p52
      %p59 = scmp.eq.s32.totalorder %s31, 1
      %p60 = por %p58, %p59
      %p61 = scmp.ne.s32.totalorder %s53, %s56
      %p62 = scmp.eq.s32.totalorder %s31, 0
      %p63 = por %p61, %p62
      %p64 = scmp.ne.s32.totalorder %s53, %s56
      %p65 = scmp.eq.s32.totalorder %s36, 1
      %p66 = por %p64, %p65
      %p67 = scmp.ne.s32.totalorder %s56, %s57
      %p68 = scmp.eq.s32.totalorder %s36, 0
      %p69 = por %p67, %p68
      %p70 = scmp.ne.s32.totalorder %s56, %s57
      %p71 = scmp.eq.s32.totalorder %s37, 1
      %p72 = por %p70, %p71
      %p74 = scmp.ne.s32.totalorder %s57, %s73
      %p75 = scmp.eq.s32.totalorder %s37, 0
      %p76 = por %p74, %p75
      %s77 = ssub.s32 %s38, %s50
      %p78 = scmp.eq.s32.totalorder %s77, 0
      %s80 = sadd.s32 %s79, 1
      %s81 = scalar_select %p78, %s79, %s80
      %p84 = pneg %p78
      %p85 = scmp.eq.s32.totalorder %s31, 1
      %p86 = por %p84, %p85
      %p87 = scmp.ne.s32.totalorder %s79, %s82
      %p88 = scmp.eq.s32.totalorder %s31, 0
      %p89 = por %p87, %p88
      %p90 = scmp.ne.s32.totalorder %s79, %s82
      %p91 = scmp.eq.s32.totalorder %s36, 1
      %p92 = por %p90, %p91
      %p93 = scmp.ne.s32.totalorder %s82, %s83
      %p94 = scmp.eq.s32.totalorder %s36, 0
      %p95 = por %p93, %p94
      %p96 = scmp.ne.s32.totalorder %s82, %s83
      %p97 = scmp.eq.s32.totalorder %s37, 1
      %p98 = por %p96, %p97
      %p100 = scmp.ne.s32.totalorder %s83, %s99
      %p101 = scmp.eq.s32.totalorder %s37, 0
      %p102 = por %p100, %p101
      %s104 = sadd.s32 %s103, 1
      %p107 = scmp.eq.s32.totalorder %s31, 1
      %p108 = scmp.ne.s32.totalorder %s103, %s105
      %p109 = scmp.eq.s32.totalorder %s31, 0
      %p110 = por %p108, %p109
      %p111 = scmp.ne.s32.totalorder %s103, %s105
      %p112 = scmp.eq.s32.totalorder %s36, 1
      %p113 = por %p111, %p112
      %p114 = scmp.ne.s32.totalorder %s105, %s106
      %p115 = scmp.eq.s32.totalorder %s36, 0
      %p116 = por %p114, %p115
      %p117 = scmp.ne.s32.totalorder %s105, %s106
      %p118 = scmp.eq.s32.totalorder %s37, 1
      %p119 = por %p117, %p118
      %p121 = scmp.ne.s32.totalorder %s106, %s120
      %p122 = scmp.eq.s32.totalorder %s37, 0
      %p123 = por %p121, %p122
      %s125 = sadd.s32 %s124, 1
      %p128 = scmp.eq.s32.totalorder %s31, 1
      %p129 = scmp.ne.s32.totalorder %s124, %s126
      %p130 = scmp.eq.s32.totalorder %s31, 0
      %p131 = por %p129, %p130
      %p132 = scmp.ne.s32.totalorder %s124, %s126
      %p133 = scmp.eq.s32.totalorder %s36, 1
      %p134 = por %p132, %p133
      %p135 = scmp.ne.s32.totalorder %s126, %s127
      %p136 = scmp.eq.s32.totalorder %s36, 0
      %p137 = por %p135, %p136
      %p138 = scmp.ne.s32.totalorder %s126, %s127
      %p139 = scmp.eq.s32.totalorder %s37, 1
      %p140 = por %p138, %p139
      %p142 = scmp.ne.s32.totalorder %s127, %s141
      %p143 = scmp.eq.s32.totalorder %s37, 0
      %p144 = por %p142, %p143
      %s146 = sadd.s32 %s145, 1
      %p149 = scmp.eq.s32.totalorder %s31, 1
      %p150 = scmp.ne.s32.totalorder %s145, %s147
      %p151 = scmp.eq.s32.totalorder %s31, 0
      %p152 = por %p150, %p151
      %p153 = scmp.ne.s32.totalorder %s145, %s147
      %p154 = scmp.eq.s32.totalorder %s36, 1
      %p155 = por %p153, %p154
      %p156 = scmp.ne.s32.totalorder %s147, %s148
      %p157 = scmp.eq.s32.totalorder %s36, 0
      %p158 = por %p156, %p157
      %p159 = scmp.ne.s32.totalorder %s147, %s148
      %p160 = scmp.eq.s32.totalorder %s37, 1
      %p161 = por %p159, %p160
      %p163 = scmp.ne.s32.totalorder %s148, %s162
      %p164 = scmp.eq.s32.totalorder %s37, 0
      %p165 = por %p163, %p164
      %s167 = sadd.s32 %s166, 1
      %p170 = scmp.eq.s32.totalorder %s31, 1
      %p171 = scmp.ne.s32.totalorder %s166, %s168
      %p172 = scmp.eq.s32.totalorder %s31, 0
      %p173 = por %p171, %p172
      %p174 = scmp.ne.s32.totalorder %s166, %s168
      %p175 = scmp.eq.s32.totalorder %s36, 1
      %p176 = por %p174, %p175
      %p177 = scmp.ne.s32.totalorder %s168, %s169
      %p178 = scmp.eq.s32.totalorder %s36, 0
      %p179 = por %p177, %p178
      %p180 = scmp.ne.s32.totalorder %s168, %s169
      %p181 = scmp.eq.s32.totalorder %s37, 1
      %p182 = por %p180, %p181
      %p184 = scmp.ne.s32.totalorder %s169, %s183
      %p185 = scmp.eq.s32.totalorder %s37, 0
      %p186 = por %p184, %p185
      %s188 = sadd.s32 %s187, 1
      %p191 = scmp.eq.s32.totalorder %s31, 1
      %p192 = scmp.ne.s32.totalorder %s187, %s189
      %p193 = scmp.eq.s32.totalorder %s31, 0
      %p194 = por %p192, %p193
      %p195 = scmp.ne.s32.totalorder %s187, %s189
      %p196 = scmp.eq.s32.totalorder %s36, 1
      %p197 = por %p195, %p196
      %p198 = scmp.ne.s32.totalorder %s189, %s190
      %p199 = scmp.eq.s32.totalorder %s36, 0
      %p200 = por %p198, %p199
      %p201 = scmp.ne.s32.totalorder %s189, %s190
      %p202 = scmp.eq.s32.totalorder %s37, 1
      %p203 = por %p201, %p202
      %p205 = scmp.ne.s32.totalorder %s190, %s204
      %p206 = scmp.eq.s32.totalorder %s37, 0
      %p207 = por %p205, %p206
      %s209 = sadd.s32 %s208, 1
      %p212 = scmp.eq.s32.totalorder %s31, 1
      %p213 = scmp.ne.s32.totalorder %s208, %s210
      %p214 = scmp.eq.s32.totalorder %s31, 0
      %p215 = por %p213, %p214
      %p216 = scmp.ne.s32.totalorder %s208, %s210
      %p217 = scmp.eq.s32.totalorder %s36, 1
      %p218 = por %p216, %p217
      %p219 = scmp.ne.s32.totalorder %s210, %s211
      %p220 = scmp.eq.s32.totalorder %s36, 0
      %p221 = por %p219, %p220
      %p222 = scmp.ne.s32.totalorder %s210, %s211
      %p223 = scmp.eq.s32.totalorder %s37, 1
      %p224 = por %p222, %p223
      %p226 = scmp.ne.s32.totalorder %s211, %s225
      %p227 = scmp.eq.s32.totalorder %s37, 0
      %p228 = por %p226, %p227
      %s230 = sadd.s32 %s229, 1
      %p233 = scmp.eq.s32.totalorder %s31, 1
      %p234 = scmp.ne.s32.totalorder %s229, %s231
      %p235 = scmp.eq.s32.totalorder %s31, 0
      %p236 = por %p234, %p235
      %p237 = scmp.ne.s32.totalorder %s229, %s231
      %p238 = scmp.eq.s32.totalorder %s36, 1
      %p239 = por %p237, %p238
      %p240 = scmp.ne.s32.totalorder %s231, %s232
      %p241 = scmp.eq.s32.totalorder %s36, 0
      %p242 = por %p240, %p241
      %p243 = scmp.ne.s32.totalorder %s231, %s232
      %p244 = scmp.eq.s32.totalorder %s37, 1
      %p245 = por %p243, %p244
      %p247 = scmp.ne.s32.totalorder %s232, %s246
      %p248 = scmp.eq.s32.totalorder %s37, 0
      %p249 = por %p247, %p248
      %s251 = sadd.s32 %s250, 1
      %p254 = scmp.eq.s32.totalorder %s31, 1
      %p255 = scmp.ne.s32.totalorder %s250, %s252
      %p256 = scmp.eq.s32.totalorder %s31, 0
      %p257 = por %p255, %p256
      %p258 = scmp.ne.s32.totalorder %s250, %s252
      %p259 = scmp.eq.s32.totalorder %s36, 1
      %p260 = por %p258, %p259
      %p261 = scmp.ne.s32.totalorder %s252, %s253
      %p262 = scmp.eq.s32.totalorder %s36, 0
      %p263 = por %p261, %p262
      %p264 = scmp.ne.s32.totalorder %s252, %s253
      %p265 = scmp.eq.s32.totalorder %s37, 1
      %p266 = por %p264, %p265
      %p268 = scmp.ne.s32.totalorder %s253, %s267
      %p269 = scmp.eq.s32.totalorder %s37, 0
      %p270 = por %p268, %p269
      %s272 = sadd.s32 %s271, 1
      %p275 = scmp.eq.s32.totalorder %s31, 1
      %p276 = scmp.ne.s32.totalorder %s271, %s273
      %p277 = scmp.eq.s32.totalorder %s31, 0
      %p278 = por %p276, %p277
      %p279 = scmp.ne.s32.totalorder %s271, %s273
      %p280 = scmp.eq.s32.totalorder %s36, 1
      %p281 = por %p279, %p280
      %p282 = scmp.ne.s32.totalorder %s273, %s274
      %p283 = scmp.eq.s32.totalorder %s36, 0
      %p284 = por %p282, %p283
      %p285 = scmp.ne.s32.totalorder %s273, %s274
      %p286 = scmp.eq.s32.totalorder %s37, 1
      %p287 = por %p285, %p286
      %p289 = scmp.ne.s32.totalorder %s274, %s288
      %p290 = scmp.eq.s32.totalorder %s37, 0
      %p291 = por %p289, %p290
      %s293 = sadd.s32 %s292, 1
      %p296 = scmp.eq.s32.totalorder %s31, 1
      %p297 = scmp.ne.s32.totalorder %s292, %s294
      %p298 = scmp.eq.s32.totalorder %s31, 0
      %p299 = por %p297, %p298
      %p300 = scmp.ne.s32.totalorder %s292, %s294
      %p301 = scmp.eq.s32.totalorder %s36, 1
      %p302 = por %p300, %p301
      %p303 = scmp.ne.s32.totalorder %s294, %s295
      %p304 = scmp.eq.s32.totalorder %s36, 0
      %p305 = por %p303, %p304
      %p306 = scmp.ne.s32.totalorder %s294, %s295
      %p307 = scmp.eq.s32.totalorder %s37, 1
      %p308 = por %p306, %p307
      %p310 = scmp.ne.s32.totalorder %s295, %s309
      %p311 = scmp.eq.s32.totalorder %s37, 0
      %p312 = por %p310, %p311
      %s314 = sadd.s32 %s313, 1
      %p317 = scmp.eq.s32.totalorder %s31, 1
      %p318 = scmp.ne.s32.totalorder %s313, %s315
      %p319 = scmp.eq.s32.totalorder %s31, 0
      %p320 = por %p318, %p319
      %p321 = scmp.ne.s32.totalorder %s313, %s315
      %p322 = scmp.eq.s32.totalorder %s36, 1
      %p323 = por %p321, %p322
      %p324 = scmp.ne.s32.totalorder %s315, %s316
      %p325 = scmp.eq.s32.totalorder %s36, 0
      %p326 = por %p324, %p325
      %p327 = scmp.ne.s32.totalorder %s315, %s316
      %p328 = scmp.eq.s32.totalorder %s37, 1
      %p329 = por %p327, %p328
      %p331 = scmp.ne.s32.totalorder %s316, %s330
      %p332 = scmp.eq.s32.totalorder %s37, 0
      %p333 = por %p331, %p332
      %s335 = sadd.s32 %s334, 1
      %p338 = scmp.eq.s32.totalorder %s31, 1
      %p339 = scmp.ne.s32.totalorder %s334, %s336
      %p340 = scmp.eq.s32.totalorder %s31, 0
      %p341 = por %p339, %p340
      %p342 = scmp.ne.s32.totalorder %s334, %s336
      %p343 = scmp.eq.s32.totalorder %s36, 1
      %p344 = por %p342, %p343
      %p345 = scmp.ne.s32.totalorder %s336, %s337
      %p346 = scmp.eq.s32.totalorder %s36, 0
      %p347 = por %p345, %p346
      %p348 = scmp.ne.s32.totalorder %s336, %s337
      %p349 = scmp.eq.s32.totalorder %s37, 1
      %p350 = por %p348, %p349
      %p352 = scmp.ne.s32.totalorder %s337, %s351
      %p353 = scmp.eq.s32.totalorder %s37, 0
      %p354 = por %p352, %p353
      %s356 = sadd.s32 %s355, 1
      %p359 = scmp.eq.s32.totalorder %s31, 1
      %p360 = scmp.ne.s32.totalorder %s355, %s357
      %p361 = scmp.eq.s32.totalorder %s31, 0
      %p362 = por %p360, %p361
      %p363 = scmp.ne.s32.totalorder %s355, %s357
      %p364 = scmp.eq.s32.totalorder %s36, 1
      %p365 = por %p363, %p364
      %p366 = scmp.ne.s32.totalorder %s357, %s358
      %p367 = scmp.eq.s32.totalorder %s36, 0
      %p368 = por %p366, %p367
      %p369 = scmp.ne.s32.totalorder %s357, %s358
      %p370 = scmp.eq.s32.totalorder %s37, 1
      %p371 = por %p369, %p370
      %p373 = scmp.ne.s32.totalorder %s358, %s372
      %p374 = scmp.eq.s32.totalorder %s37, 0
      %p375 = por %p373, %p374
      %s377 = sadd.s32 %s376, 1
      %p380 = scmp.eq.s32.totalorder %s31, 1
      %p381 = scmp.ne.s32.totalorder %s376, %s378
      %p382 = scmp.eq.s32.totalorder %s31, 0
      %p383 = por %p381, %p382
      %p384 = scmp.ne.s32.totalorder %s376, %s378
      %p385 = scmp.eq.s32.totalorder %s36, 1
      %p386 = por %p384, %p385
      %p387 = scmp.ne.s32.totalorder %s378, %s379
      %p388 = scmp.eq.s32.totalorder %s36, 0
      %p389 = por %p387, %p388
      %p390 = scmp.ne.s32.totalorder %s378, %s379
      %p391 = scmp.eq.s32.totalorder %s37, 1
      %p392 = por %p390, %p391
      %p394 = scmp.ne.s32.totalorder %s379, %s393
      %p395 = scmp.eq.s32.totalorder %s37, 0
      %p396 = por %p394, %p395
      %s398 = sadd.s32 %s397, 1
      %p401 = scmp.eq.s32.totalorder %s31, 1
      %p402 = scmp.ne.s32.totalorder %s397, %s399
      %p403 = scmp.eq.s32.totalorder %s31, 0
      %p404 = por %p402, %p403
      %p405 = scmp.ne.s32.totalorder %s397, %s399
      %p406 = scmp.eq.s32.totalorder %s36, 1
      %p407 = por %p405, %p406
      %p408 = scmp.ne.s32.totalorder %s399, %s400
      %p409 = scmp.eq.s32.totalorder %s36, 0
      %p410 = por %p408, %p409
      %p411 = scmp.ne.s32.totalorder %s399, %s400
      %p412 = scmp.eq.s32.totalorder %s37, 1
      %p413 = por %p411, %p412
      %p415 = scmp.ne.s32.totalorder %s400, %s414
      %p416 = scmp.eq.s32.totalorder %s37, 0
      %p417 = por %p415, %p416
      %s419 = sadd.s32 %s418, 1
      %p422 = scmp.eq.s32.totalorder %s31, 1
      %p423 = scmp.ne.s32.totalorder %s418, %s420
      %p424 = scmp.eq.s32.totalorder %s31, 0
      %p425 = por %p423, %p424
      %p426 = scmp.ne.s32.totalorder %s418, %s420
      %p427 = scmp.eq.s32.totalorder %s36, 1
      %p428 = por %p426, %p427
      %p429 = scmp.ne.s32.totalorder %s420, %s421
      %p430 = scmp.eq.s32.totalorder %s36, 0
      %p431 = por %p429, %p430
      %p432 = scmp.ne.s32.totalorder %s420, %s421
      %p433 = scmp.eq.s32.totalorder %s37, 1
      %p434 = por %p432, %p433
      %p436 = scmp.ne.s32.totalorder %s421, %s435
      %p437 = scmp.eq.s32.totalorder %s37, 0
      %p438 = por %p436, %p437
      %s439 = ssub.s32 %s38, %s50
      %s440 = ssub.s32 %s39, %s46
      %s441 = sor.u32 %s439, %s440
      %p442 = scmp.eq.s32.totalorder %s441, 0
      %s444 = sadd.s32 %s443, 1
      %s445 = scalar_select %p442, %s443, %s444
      %p448 = pneg %p442
      %p449 = scmp.eq.s32.totalorder %s31, 1
      %p450 = por %p448, %p449
      %p451 = scmp.ne.s32.totalorder %s443, %s446
      %p452 = scmp.eq.s32.totalorder %s31, 0
      %p453 = por %p451, %p452
      %p454 = scmp.ne.s32.totalorder %s443, %s446
      %p455 = scmp.eq.s32.totalorder %s36, 1
      %p456 = por %p454, %p455
      %p457 = scmp.ne.s32.totalorder %s446, %s447
      %p458 = scmp.eq.s32.totalorder %s36, 0
      %p459 = por %p457, %p458
      %p460 = scmp.ne.s32.totalorder %s446, %s447
      %p461 = scmp.eq.s32.totalorder %s37, 1
      %p462 = por %p460, %p461
      %p464 = scmp.ne.s32.totalorder %s447, %s463
      %p465 = scmp.eq.s32.totalorder %s37, 0
      %p466 = por %p464, %p465
      %p467 = scmp.le.s32.totalorder 1, %s31
      %p468 = scmp.lt.s32.totalorder %s31, 3
      %p469 = pnand %p467, %p468
      %p470 = pneg %p469
      // Predicated region
      $region9: #{tpu_custom_call.1} parent=5 // pred_check
        _
      $region10: #{tpu_custom_call.1} parent=5 // pred_check_branch
        %472 = sbr.rel (%p469) target = $region12
      $region11: #{tpu_custom_call.1} parent=5 // pred_region
        %s473 = ssub.s32 %s31, 1
        // Predicated region
        $region13: #{tpu_custom_call.1} parent=11 // pred_check
          %p474 = pneg %p116
        $region14: #{tpu_custom_call.1} parent=11 // pred_check_branch
          %476 = sbr.rel (%p474) target = $region16
        $region15: #{tpu_custom_call.1} parent=11 // pred_region
          _
        $region16: #{tpu_custom_call.1} parent=11 // pred_fallthru
          _
        // Predicated region
        $region17: #{tpu_custom_call.1} parent=11 // pred_check
          %p477 = pneg %p137
        $region18: #{tpu_custom_call.1} parent=11 // pred_check_branch
          %479 = sbr.rel (%p477) target = $region20
        $region19: #{tpu_custom_call.1} parent=11 // pred_region
          _
        $region20: #{tpu_custom_call.1} parent=11 // pred_fallthru
          _
        // Predicated region
        $region21: #{tpu_custom_call.1} parent=11 // pred_check
          %p480 = pneg %p158
        $region22: #{tpu_custom_call.1} parent=11 // pred_check_branch
          %482 = sbr.rel (%p480) target = $region24
        $region23: #{tpu_custom_call.1} parent=11 // pred_region
          _
        $region24: #{tpu_custom_call.1} parent=11 // pred_fallthru
          _
        // Predicated region
        $region25: #{tpu_custom_call.1} parent=11 // pred_check
          %p483 = pneg %p179
        $region26: #{tpu_custom_call.1} parent=11 // pred_check_branch
          %485 = sbr.rel (%p483) target = $region28
        $region27: #{tpu_custom_call.1} parent=11 // pred_region
          _
        $region28: #{tpu_custom_call.1} parent=11 // pred_fallthru
          _
        // Predicated region
        $region29: #{tpu_custom_call.1} parent=11 // pred_check
          %p486 = pneg %p200
        $region30: #{tpu_custom_call.1} parent=11 // pred_check_branch
          %488 = sbr.rel (%p486) target = $region32
        $region31: #{tpu_custom_call.1} parent=11 // pred_region
          _
        $region32: #{tpu_custom_call.1} parent=11 // pred_fallthru
          _
        // Predicated region
        $region33: #{tpu_custom_call.1} parent=11 // pred_check
          %p489 = pneg %p221
        $region34: #{tpu_custom_call.1} parent=11 // pred_check_branch
          %491 = sbr.rel (%p489) target = $region36
        $region35: #{tpu_custom_call.1} parent=11 // pred_region
          _
        $region36: #{tpu_custom_call.1} parent=11 // pred_fallthru
          _
        // Predicated region
        $region37: #{tpu_custom_call.1} parent=11 // pred_check
          %p492 = pneg %p242
        $region38: #{tpu_custom_call.1} parent=11 // pred_check_branch
          %494 = sbr.rel (%p492) target = $region40
        $region39: #{tpu_custom_call.1} parent=11 // pred_region
          _
        $region40: #{tpu_custom_call.1} parent=11 // pred_fallthru
          _
        // Predicated region
        $region41: #{tpu_custom_call.1} parent=11 // pred_check
          %p495 = pneg %p263
        $region42: #{tpu_custom_call.1} parent=11 // pred_check_branch
          %497 = sbr.rel (%p495) target = $region44
        $region43: #{tpu_custom_call.1} parent=11 // pred_region
          _
        $region44: #{tpu_custom_call.1} parent=11 // pred_fallthru
          _
        // Predicated region
        $region45: #{tpu_custom_call.1} parent=11 // pred_check
          %p498 = pneg %p284
        $region46: #{tpu_custom_call.1} parent=11 // pred_check_branch
          %500 = sbr.rel (%p498) target = $region48
        $region47: #{tpu_custom_call.1} parent=11 // pred_region
          _
        $region48: #{tpu_custom_call.1} parent=11 // pred_fallthru
          _
        // Predicated region
        $region49: #{tpu_custom_call.1} parent=11 // pred_check
          %p501 = pneg %p305
        $region50: #{tpu_custom_call.1} parent=11 // pred_check_branch
          %503 = sbr.rel (%p501) target = $region52
        $region51: #{tpu_custom_call.1} parent=11 // pred_region
          _
        $region52: #{tpu_custom_call.1} parent=11 // pred_fallthru
          _
        // Predicated region
        $region53: #{tpu_custom_call.1} parent=11 // pred_check
          %p504 = pneg %p326
        $region54: #{tpu_custom_call.1} parent=11 // pred_check_branch
          %506 = sbr.rel (%p504) target = $region56
        $region55: #{tpu_custom_call.1} parent=11 // pred_region
          _
        $region56: #{tpu_custom_call.1} parent=11 // pred_fallthru
          _
        // Predicated region
        $region57: #{tpu_custom_call.1} parent=11 // pred_check
          %p507 = pneg %p347
        $region58: #{tpu_custom_call.1} parent=11 // pred_check_branch
          %509 = sbr.rel (%p507) target = $region60
        $region59: #{tpu_custom_call.1} parent=11 // pred_region
          _
        $region60: #{tpu_custom_call.1} parent=11 // pred_fallthru
          _
        // Predicated region
        $region61: #{tpu_custom_call.1} parent=11 // pred_check
          %p510 = pneg %p368
        $region62: #{tpu_custom_call.1} parent=11 // pred_check_branch
          %512 = sbr.rel (%p510) target = $region64
        $region63: #{tpu_custom_call.1} parent=11 // pred_region
          %514 = vsyncadd [#allocation8], 0
          %s515 = sshll.u32 %s14, 4
          %s516 = int_to_ptr.hbm [resolvable:$true] %s515
          %s517 = sshll.u32 [#allocation7], 4
          %s518 = int_to_ptr.vmem [resolvable:$true] %s517
          %523 = dma.hbm_to_vmem [thread:$0]  %s516, 256, %s518, [#allocation8], 64, 64, 4
        $region64: #{tpu_custom_call.1} parent=11 // pred_fallthru
          _
        // Predicated region
        $region65: #{tpu_custom_call.1} parent=11 // pred_check
          %p524 = pneg %p389
        $region66: #{tpu_custom_call.1} parent=11 // pred_check_branch
          %526 = sbr.rel (%p524) target = $region68
        $region67: #{tpu_custom_call.1} parent=11 // pred_region
          _
        $region68: #{tpu_custom_call.1} parent=11 // pred_fallthru
          _
        // Predicated region
        $region69: #{tpu_custom_call.1} parent=11 // pred_check
          %p527 = pneg %p410
        $region70: #{tpu_custom_call.1} parent=11 // pred_check_branch
          %529 = sbr.rel (%p527) target = $region72
        $region71: #{tpu_custom_call.1} parent=11 // pred_region
          _
        $region72: #{tpu_custom_call.1} parent=11 // pred_fallthru
          _
        // Predicated region
        $region73: #{tpu_custom_call.1} parent=11 // pred_check
          %p530 = pneg %p431
        $region74: #{tpu_custom_call.1} parent=11 // pred_check_branch
          %532 = sbr.rel (%p530) target = $region76
        $region75: #{tpu_custom_call.1} parent=11 // pred_region
          _
        $region76: #{tpu_custom_call.1} parent=11 // pred_fallthru
          _
      $region12: #{tpu_custom_call.1} parent=5 // pred_fallthru
        _
      %p533 = scmp.lt.s32.totalorder %s31, 2
      // Predicated region
      $region77: #{tpu_custom_call.1} parent=5 // pred_check
        %p534 = pneg %p533
      $region78: #{tpu_custom_call.1} parent=5 // pred_check_branch
        %536 = sbr.rel (%p534) target = $region80
      $region79: #{tpu_custom_call.1} parent=5 // pred_region
        // Predicated region
        $region81: #{tpu_custom_call.1} parent=79 // pred_check
          %p537 = pneg %p63
        $region82: #{tpu_custom_call.1} parent=79 // pred_check_branch
          %539 = sbr.rel (%p537) target = $region84
        $region83: #{tpu_custom_call.1} parent=79 // pred_region
          %p540 = scmp.lt.s32.totalorder %s38, 1
          %s541 = scalar_select %p540, %s38, 1
          %s542 = smul.addr %s541, 8
          %s543 = scalar_lea.vmem %s0, %s542
        $region84: #{tpu_custom_call.1} parent=79 // pred_fallthru
          _
        // Predicated region
        $region85: #{tpu_custom_call.1} parent=79 // pred_check
          %p544 = pneg %p89
        $region86: #{tpu_custom_call.1} parent=79 // pred_check_branch
          %546 = sbr.rel (%p544) target = $region88
        $region87: #{tpu_custom_call.1} parent=79 // pred_region
          %s547 = sand.u32 %s79, 1
          %s548 = scalar_lea.sflag [#allocation5], %s547
          %s549 = sand.u32 %s79, 1
          %s550 = scalar_lea.vmem [#allocation4], %s549
          %552 = vsyncadd %s548, 0
          %s553 = scalar_lea.hbm %s1, %s38
          %s555 = sshll.u32 %s553, 4
          %s556 = int_to_ptr.hbm [resolvable:$true] %s555
          %s557 = sshll.u32 %s550, 4
          %s558 = int_to_ptr.vmem [resolvable:$true] %s557
          %560 = dma.hbm_to_vmem [thread:$0]  %s556, 16, %s558, %s548
        $region88: #{tpu_custom_call.1} parent=79 // pred_fallthru
          _
      $region80: #{tpu_custom_call.1} parent=5 // pred_fallthru
        _
      %p561 = scmp.le.s32.totalorder 1, %s31
      %p562 = scmp.lt.s32.totalorder %s31, 3
      %p563 = pnand %p561, %p562
      %p564 = pneg %p563
      // Predicated region
      $region89: #{tpu_custom_call.1} parent=5 // pred_check
        _
      $region90: #{tpu_custom_call.1} parent=5 // pred_check_branch
        %566 = sbr.rel (%p563) target = $region92
      $region91: #{tpu_custom_call.1} parent=5 // pred_region
        %s567 = ssub.s32 %s31, 1
        %s568 = sand.u32 %s82, 1
        %s569 = scalar_lea.sflag [#allocation5], %s568
        %s570 = sand.u32 %s82, 1
        %s571 = scalar_lea.vmem [#allocation4], %s570
        // Predicated region
        $region93: #{tpu_custom_call.1} parent=91 // pred_check
          %p572 = pneg %p95
        $region94: #{tpu_custom_call.1} parent=91 // pred_check_branch
          %574 = sbr.rel (%p572) target = $region96
        $region95: #{tpu_custom_call.1} parent=91 // pred_region
          %576 = dma.done %s569, 16
        $region96: #{tpu_custom_call.1} parent=91 // pred_fallthru
          _
        // Predicated region
        $region97: #{tpu_custom_call.1} parent=91 // pred_check
          %p577 = pneg %p368
        $region98: #{tpu_custom_call.1} parent=91 // pred_check_branch
          %579 = sbr.rel (%p577) target = $region100
        $region99: #{tpu_custom_call.1} parent=91 // pred_region
          %581 = dma.done [#allocation8], 256
        $region100: #{tpu_custom_call.1} parent=91 // pred_fallthru
          _
        %p582 = scmp.lt.s32.totalorder %s40, 1
        %s583 = scalar_select %p582, %s40, 1
        %s584 = smul.addr %s583, 8
        %s585 = scalar_lea.vmem %s0, %s584
        %p586 = pneg %p69
        %p587 = pneg %p66
        %s588 = sand.u32 %s82, 1
        %s589 = scalar_lea.sflag [#allocation5], %s588
        %s590 = sand.u32 %s82, 1
        %s591 = scalar_lea.vmem [#allocation4], %s590
        %p592 = pneg %p95
        %p593 = pneg %p92
        %p594 = pneg %p116
        %p595 = pneg %p113
        %p596 = pneg %p137
        %p597 = pneg %p134
        %p598 = pneg %p158
        %p599 = pneg %p155
        %p600 = pneg %p179
        %p601 = pneg %p176
        %p602 = pneg %p200
        %p603 = pneg %p197
        %p604 = pneg %p221
        %p605 = pneg %p218
        %p606 = pneg %p242
        %p607 = pneg %p239
        %p608 = pneg %p263
        %p609 = pneg %p260
        %p610 = pneg %p284
        %p611 = pneg %p281
        %p612 = pneg %p305
        %p613 = pneg %p302
        %p614 = pneg %p326
        %p615 = pneg %p323
        %p616 = pneg %p347
        %p617 = pneg %p344
        %p618 = pneg %p368
        %p619 = pneg %p365
        %p620 = pneg %p389
        %p621 = pneg %p386
        %p622 = pneg %p410
        %p623 = pneg %p407
        %p624 = pneg %p431
        %p625 = pneg %p428
        %p626 = pneg %p459
        %p627 = pneg %p456
        %s628 = sand.u32 %s446, 1
        %s629 = scalar_lea.sflag [#allocation6], %s628
        %s630 = sand.u32 %s446, 1
        %s631 = smul.addr %s630, 8
        %s632 = scalar_lea.vmem [#allocation9], %s631
        %p633 = scmp.lt.s32.totalorder %s40, 1
        %s634 = scalar_select %p633, %s40, 1
        %s635 = smul.addr %s634, 8
        %s636 = scalar_lea.vmem %s0, %s635
        %v638 = vld [vmem:[%s2] sm:$0x1]
        %v639 = vld [vmem:[%s3] sm:$0x1]
        %p640 = scmp.eq.s32.totalorder %s41, 0
        // Predicated region
        $region101: #{tpu_custom_call.1} parent=91 // pred_check
          %p641 = pneg %p640
        $region102: #{tpu_custom_call.1} parent=91 // pred_check_branch
          %643 = sbr.rel (%p641) target = $region104
        $region103: #{tpu_custom_call.1} parent=91 // pred_region
          %v644 = vld [vmem:[%s636] sm:$0xff]
          %vm645 = vcmask 261120
          %v646 = vsel %vm645, %v644, 0.0
          %647 = vadd.xlane.f32.xlu0 %v646
          %v648 = vpop.xlane.xlu0 %647
          %v649 = vrcp.pop 32.0
          %v650 = vmul.f32 32.0, %v649
          %v651 = vsub.f32 1.0, %v650
          %v652 = vmul.f32 %v649, %v651
          %v653 = vadd.f32 %v649, %v652
          %vm654 = vweird.f32 %v649
          %v655 = vsel %vm654, %v649, %v653
          %v656 = vmul.f32 %v648, %v655
          %v657 = vsub.f32 %v644, %v656
          %v658 = vmul.f32 %v657, %v657
          %v659 = vsel %vm645, %v658, 0.0
          %660 = vadd.xlane.f32.xlu0 %v659
          %v661 = vpop.xlane.xlu0 %660
          %v662 = vmul.f32 %v661, %v655
          %v663 = vadd.f32 %v662, 1e-05
          %v664 = vrsqrt.pop %v663
          %v665 = vmul.f32 %v664, %v663
          %v666 = vmul.f32 %v665, %v664
          %v667 = vmul.f32 0.5, %v666
          %v668 = vsub.f32 1.5, %v667
          %v669 = vmul.f32 %v664, %v668
          %vm670 = vweird.f32 %v663
          %vm671 = vweird.f32 %v664
          %vm672 = vmor %vm670, %vm671
          %v673 = vsel %vm672, %v664, %v669
          %v674 = vmul.f32 %v657, %v673
          %v676 = vperm.slane %v638, 0
          %v678 = vmul.f32 %v674, %v676
          %v680 = vperm.slane %v639, 0
          %v682 = vadd.f32 %v678, %v680
          %v683 = vpack.c.bf16 %v682, %v682
          %v684 = vld [vmem:[%s6] sm:$0xf]
          %v685 = vld [vmem:[%s6 + $0x4] sm:$0xf]
          %v686 = vld [vmem:[%s6 + $0x8] sm:$0xf]
          %v687 = vld [vmem:[%s6 + $0xc] sm:$0xf]
          %v688 = vld [vmem:[%s7] sm:$0x1]
          %v690 = vperm.slane %v688, 0
          %v696 = vunpack.c.l.b16 %v684
          %v697 = vunpack.c.l.b16 %v685
          %v698 = vunpack.c.l.b16 %v686
          %v699 = vunpack.c.l.b16 %v687
          %v700 = vpack.c.b16 %v697, %v696
          %v701 = vpack.c.b16 %v699, %v698
          %v705 = vsel %vm645, %v683, 0
          %707 = vmatpush.bf16.msra.mxu0 0
          %708 = vmatpush.bf16.msra.mxu0 0
          %709 = vmatpush.bf16.msra.mxu0 0
          %710 = vmatpush.bf16.msra.mxu0 0
          %711 = vmatpush.bf16.msra.mxu0 0
          %712 = vmatpush.bf16.msra.mxu0 0
          %713 = vmatpush.bf16.msra.mxu0 %v701
          %714 = vmatpush.bf16.msra.mxu0 %v700
          %715 = vmatmul.bf16.gmra.mxu0 %v705
          %v716 = vpop.f32.mrf.mxu0
          %v717 = vadd.f32 %v690, %v716
          %v718 = vpop.f32.mrf.mxu0
          %719 = vdwg.mxu0
          %v720 = vld [vmem:[%s8] sm:$0xf]
          %v721 = vld [vmem:[%s8 + $0x4] sm:$0xf]
          %v722 = vld [vmem:[%s8 + $0x8] sm:$0xf]
          %v723 = vld [vmem:[%s8 + $0xc] sm:$0xf]
          %v724 = vld [vmem:[%s9] sm:$0x1]
          %v726 = vperm.slane %v724, 0
          %v732 = vunpack.c.l.b16 %v720
          %v733 = vunpack.c.l.b16 %v721
          %v734 = vunpack.c.l.b16 %v722
          %v735 = vunpack.c.l.b16 %v723
          %v736 = vpack.c.b16 %v733, %v732
          %v737 = vpack.c.b16 %v735, %v734
          %740 = vmatpush.bf16.msra.mxu0 0
          %741 = vmatpush.bf16.msra.mxu0 0
          %742 = vmatpush.bf16.msra.mxu0 0
          %743 = vmatpush.bf16.msra.mxu0 0
          %744 = vmatpush.bf16.msra.mxu0 0
          %745 = vmatpush.bf16.msra.mxu0 0
          %746 = vmatpush.bf16.msra.mxu0 %v737
          %747 = vmatpush.bf16.msra.mxu0 %v736
          %748 = vmatmul.bf16.gmra.mxu0 %v705
          %v749 = vpop.f32.mrf.mxu0
          %v750 = vadd.f32 %v726, %v749
          %v751 = vpop.f32.mrf.mxu0
          %752 = vdwg.mxu0
          %v753 = vpack.c.bf16 %v717, %v717
          %vm754 = vcmask 60416
          %755 = vst.msk [vmem:[#allocation2] sm:$0xf] %vm754, %v753
          %v756 = vpack.c.bf16 %v750, %v750
          %757 = vst.msk [vmem:[#allocation3] sm:$0xf] %vm754, %v756
          %759 = vrot.lane.b32.xlu0 %v753, 120
          %v760 = vpop.permute.xlu0 %759
          %s762 = scalar_lea.vmem [#allocation2], 4
          %763 = vst.msk [vmem:[%s762] sm:$0xf] %vm754, %v760
          %765 = vrot.lane.b32.xlu0 %v756, 120
          %v766 = vpop.permute.xlu0 %765
          %s768 = scalar_lea.vmem [#allocation3], 4
          %769 = vst.msk [vmem:[%s768] sm:$0xf] %vm754, %v766
          %770 = vrot.lane.b32.xlu0 %v753, 112
          %v771 = vpop.permute.xlu0 %770
          %s773 = scalar_lea.vmem [#allocation2], 8
          %774 = vst.msk [vmem:[%s773] sm:$0xf] %vm754, %v771
          %775 = vrot.lane.b32.xlu0 %v756, 112
          %v776 = vpop.permute.xlu0 %775
          %s778 = scalar_lea.vmem [#allocation3], 8
          %779 = vst.msk [vmem:[%s778] sm:$0xf] %vm754, %v776
          %780 = vrot.lane.b32.xlu0 %v753, 104
          %v781 = vpop.permute.xlu0 %780
          %s783 = scalar_lea.vmem [#allocation2], 12
          %784 = vst.msk [vmem:[%s783] sm:$0xf] %vm754, %v781
          %785 = vrot.lane.b32.xlu0 %v756, 104
          %v786 = vpop.permute.xlu0 %785
          %s788 = scalar_lea.vmem [#allocation3], 12
          %789 = vst.msk [vmem:[%s788] sm:$0xf] %vm754, %v786
        $region104: #{tpu_custom_call.1} parent=91 // pred_fallthru
          _
        %s790 = smul.u32 %s41, 8
        %s791 = scalar_lea.vmem %s636, %s790
        %v792 = vld [vmem:[%s791] sm:$0xff]
        %vm793 = vcmask 261120
        %v794 = vsel %vm793, %v792, 0.0
        %795 = vadd.xlane.f32.xlu0 %v794
        %v796 = vpop.xlane.xlu0 %795
        %v797 = vrcp.pop 32.0
        %v798 = vmul.f32 32.0, %v797
        %v799 = vsub.f32 1.0, %v798
        %v800 = vmul.f32 %v797, %v799
        %v801 = vadd.f32 %v797, %v800
        %vm802 = vweird.f32 %v797
        %v803 = vsel %vm802, %v797, %v801
        %v804 = vmul.f32 %v796, %v803
        %v805 = vsub.f32 %v792, %v804
        %v806 = vmul.f32 %v805, %v805
        %v807 = vsel %vm793, %v806, 0.0
        %808 = vadd.xlane.f32.xlu0 %v807
        %v809 = vpop.xlane.xlu0 %808
        %v810 = vmul.f32 %v809, %v803
        %v811 = vadd.f32 %v810, 1e-05
        %v812 = vrsqrt.pop %v811
        %v813 = vmul.f32 %v812, %v811
        %v814 = vmul.f32 %v813, %v812
        %v815 = vmul.f32 0.5, %v814
        %v816 = vsub.f32 1.5, %v815
        %v817 = vmul.f32 %v812, %v816
        %vm818 = vweird.f32 %v811
        %vm819 = vweird.f32 %v812
        %vm820 = vmor %vm818, %vm819
        %v821 = vsel %vm820, %v812, %v817
        %v822 = vmul.f32 %v805, %v821
        %v824 = vperm.slane %v638, 0
        %v826 = vmul.f32 %v822, %v824
        %v828 = vperm.slane %v639, 0
        %v830 = vadd.f32 %v826, %v828
        %v831 = vpack.c.bf16 %v830, %v830
        %v832 = vld [vmem:[%s4] sm:$0xf]
        %v833 = vld [vmem:[%s4 + $0x4] sm:$0xf]
        %v834 = vld [vmem:[%s4 + $0x8] sm:$0xf]
        %v835 = vld [vmem:[%s4 + $0xc] sm:$0xf]
        %v836 = vld [vmem:[%s5] sm:$0x1]
        %v838 = vperm.slane %v836, 0
        %v844 = vunpack.c.l.b16 %v832
        %v845 = vunpack.c.l.b16 %v833
        %v846 = vunpack.c.l.b16 %v834
        %v847 = vunpack.c.l.b16 %v835
        %v848 = vpack.c.b16 %v845, %v844
        %v849 = vpack.c.b16 %v847, %v846
        %v853 = vsel %vm793, %v831, 0
        %855 = vmatpush.bf16.msra.mxu0 0
        %856 = vmatpush.bf16.msra.mxu0 0
        %857 = vmatpush.bf16.msra.mxu0 0
        %858 = vmatpush.bf16.msra.mxu0 0
        %859 = vmatpush.bf16.msra.mxu0 0
        %860 = vmatpush.bf16.msra.mxu0 0
        %861 = vmatpush.bf16.msra.mxu0 %v849
        %862 = vmatpush.bf16.msra.mxu0 %v848
        %863 = vmatmul.bf16.gmra.mxu0 %v853
        %v864 = vpop.f32.mrf.mxu0
        %v865 = vadd.f32 %v838, %v864
        %v866 = vpop.f32.mrf.mxu0
        %867 = vdwg.mxu0
        %v868 = vmul.f32 %v865, 0.35355338
        %870 = vrot.lane.b32.xlu0 %v868, 120
        %v871 = vpop.permute.xlu0 %870
        %873 = vrot.lane.b32.xlu0 %v868, 112
        %v874 = vpop.permute.xlu0 %873
        %876 = vrot.lane.b32.xlu0 %v868, 104
        %v877 = vpop.permute.xlu0 %876
        %v879 = vpack.c.bf16 %v868, %v868
        %v880 = vpack.c.bf16 %v871, %v871
        %v881 = vpack.c.bf16 %v874, %v874
        %v882 = vpack.c.bf16 %v877, %v877
        %v883 = vld [vmem:[%s571] sm:$0x1]
        %v884 = vlaneseq
        %v885 = vshrl.u32 %v884, 7
        %v886 = vstv %s790
        %v887 = vadd.s32 %v886, %v885
        %v888 = vlaneseq
        %v889 = vand.u32 %v888, 127
        %vm890 = vcmp.le.s32.totalorder %v889, %v887
        %v891 = vsel %vm890, 0.0, -1e+09
        %v893 = vperm.slane %v883, 0
        %v895 = vadd.f32 %v891, %v893
        %v896 = vld [vmem:[#allocation2] sm:$0xf]
        %v897 = vld [vmem:[#allocation2 + $0x4] sm:$0xf]
        %v898 = vld [vmem:[#allocation2 + $0x8] sm:$0xf]
        %v899 = vld [vmem:[#allocation2 + $0xc] sm:$0xf]
        %vm900 = vcmask 64512
        %v902 = vsel %vm900, %v879, 0
        %v905 = vsel %vm900, %v896, 0
        %907 = vmatpush.bf16.xpose.msra.mxu0 0
        %908 = vmatpush.bf16.xpose.msra.mxu0 0
        %909 = vmatpush.bf16.xpose.msra.mxu0 0
        %910 = vmatpush.bf16.xpose.msra.mxu0 0
        %911 = vmatpush.bf16.xpose.msra.mxu0 0
        %912 = vmatpush.bf16.xpose.msra.mxu0 0
        %913 = vmatpush.bf16.xpose.msra.mxu0 0
        %914 = vmatpush.bf16.xpose.msra.mxu0 %v905
        %915 = vmatmul.bf16.gmra.mxu0 %v902
        %v916 = vpop.f32.mrf.mxu0
        %v917 = vadd.f32 %v895, %v916
        %v918 = vpop.f32.mrf.mxu0
        %919 = vdwg.mxu0
        %v921 = vsel %vm900, %v880, 0
        %v924 = vsel %vm900, %v897, 0
        %926 = vmatpush.bf16.xpose.msra.mxu0 0
        %927 = vmatpush.bf16.xpose.msra.mxu0 0
        %928 = vmatpush.bf16.xpose.msra.mxu0 0
        %929 = vmatpush.bf16.xpose.msra.mxu0 0
        %930 = vmatpush.bf16.xpose.msra.mxu0 0
        %931 = vmatpush.bf16.xpose.msra.mxu0 0
        %932 = vmatpush.bf16.xpose.msra.mxu0 0
        %933 = vmatpush.bf16.xpose.msra.mxu0 %v924
        %934 = vmatmul.bf16.gmra.mxu0 %v921
        %v935 = vpop.f32.mrf.mxu0
        %v936 = vadd.f32 %v895, %v935
        %v937 = vpop.f32.mrf.mxu0
        %938 = vdwg.mxu0
        %v940 = vsel %vm900, %v881, 0
        %v943 = vsel %vm900, %v898, 0
        %945 = vmatpush.bf16.xpose.msra.mxu0 0
        %946 = vmatpush.bf16.xpose.msra.mxu0 0
        %947 = vmatpush.bf16.xpose.msra.mxu0 0
        %948 = vmatpush.bf16.xpose.msra.mxu0 0
        %949 = vmatpush.bf16.xpose.msra.mxu0 0
        %950 = vmatpush.bf16.xpose.msra.mxu0 0
        %951 = vmatpush.bf16.xpose.msra.mxu0 0
        %952 = vmatpush.bf16.xpose.msra.mxu0 %v943
        %953 = vmatmul.bf16.gmra.mxu0 %v940
        %v954 = vpop.f32.mrf.mxu0
        %v955 = vadd.f32 %v895, %v954
        %v956 = vpop.f32.mrf.mxu0
        %957 = vdwg.mxu0
        %v959 = vsel %vm900, %v882, 0
        %v962 = vsel %vm900, %v899, 0
        %964 = vmatpush.bf16.xpose.msra.mxu0 0
        %965 = vmatpush.bf16.xpose.msra.mxu0 0
        %966 = vmatpush.bf16.xpose.msra.mxu0 0
        %967 = vmatpush.bf16.xpose.msra.mxu0 0
        %968 = vmatpush.bf16.xpose.msra.mxu0 0
        %969 = vmatpush.bf16.xpose.msra.mxu0 0
        %970 = vmatpush.bf16.xpose.msra.mxu0 0
        %971 = vmatpush.bf16.xpose.msra.mxu0 %v962
        %972 = vmatmul.bf16.gmra.mxu0 %v959
        %v973 = vpop.f32.mrf.mxu0
        %v974 = vadd.f32 %v895, %v973
        %v975 = vpop.f32.mrf.mxu0
        %976 = vdwg.mxu0
        %v977 = vsel %vm900, %v917, -inf
        %978 = vmax.xlane.f32.xlu0 %v977
        %v979 = vpop.xlane.xlu0 %978
        %v980 = vsel %vm900, %v936, -inf
        %981 = vmax.xlane.f32.xlu0 %v980
        %v982 = vpop.xlane.xlu0 %981
        %v983 = vsel %vm900, %v955, -inf
        %984 = vmax.xlane.f32.xlu0 %v983
        %v985 = vpop.xlane.xlu0 %984
        %v986 = vsel %vm900, %v974, -inf
        %987 = vmax.xlane.f32.xlu0 %v986
        %v988 = vpop.xlane.xlu0 %987
        %v989 = vsub.f32 %v917, %v979
        %v990 = vsub.f32 %v936, %v982
        %v991 = vsub.f32 %v955, %v985
        %v992 = vsub.f32 %v974, %v988
        %v993 = vmul.f32 %v989, 1.442695
        %v994 = vpow.pop %v993
        %v995 = vmul.f32 %v990, 1.442695
        %v996 = vpow.pop %v995
        %v997 = vmul.f32 %v991, 1.442695
        %v998 = vpow.pop %v997
        %v999 = vmul.f32 %v992, 1.442695
        %v1000 = vpow.pop %v999
        %v1001 = vsel %vm900, %v994, 0.0
        %1002 = vadd.xlane.f32.xlu0 %v1001
        %v1003 = vpop.xlane.xlu0 %1002
        %v1004 = vsel %vm900, %v996, 0.0
        %1005 = vadd.xlane.f32.xlu0 %v1004
        %v1006 = vpop.xlane.xlu0 %1005
        %v1007 = vsel %vm900, %v998, 0.0
        %1008 = vadd.xlane.f32.xlu0 %v1007
        %v1009 = vpop.xlane.xlu0 %1008
        %v1010 = vsel %vm900, %v1000, 0.0
        %1011 = vadd.xlane.f32.xlu0 %v1010
        %v1012 = vpop.xlane.xlu0 %1011
        %v1013 = vpack.c.bf16 %v994, %v994
        %v1014 = vpack.c.bf16 %v996, %v996
        %v1015 = vpack.c.bf16 %v998, %v998
        %v1016 = vpack.c.bf16 %v1000, %v1000
        %v1017 = vld [vmem:[#allocation3] sm:$0xf]
        %v1018 = vld [vmem:[#allocation3 + $0x4] sm:$0xf]
        %v1019 = vld [vmem:[#allocation3 + $0x8] sm:$0xf]
        %v1020 = vld [vmem:[#allocation3 + $0xc] sm:$0xf]
        %v1022 = vsel %vm900, %v1013, 0
        %vm1024 = vcmask 1043456
        %v1026 = vsel %vm1024, %v1017, 0
        %1028 = vmatpush.bf16.msra.mxu0 0
        %1029 = vmatpush.bf16.msra.mxu0 0
        %1030 = vmatpush.bf16.msra.mxu0 0
        %1031 = vmatpush.bf16.msra.mxu0 0
        %1032 = vmatpush.bf16.msra.mxu0 0
        %1033 = vmatpush.bf16.msra.mxu0 0
        %1034 = vmatpush.bf16.msra.mxu0 0
        %1035 = vmatpush.bf16.msra.mxu0 %v1026
        %1036 = vmatmul.bf16.gmra.mxu0 %v1022
        %v1037 = vpop.f32.mrf.mxu0
        %v1038 = vadd.f32 0.0, %v1037
        %v1039 = vpop.f32.mrf.mxu0
        %1040 = vdwg.mxu0
        %v1042 = vsel %vm900, %v1014, 0
        %v1045 = vsel %vm1024, %v1018, 0
        %1047 = vmatpush.bf16.msra.mxu0 0
        %1048 = vmatpush.bf16.msra.mxu0 0
        %1049 = vmatpush.bf16.msra.mxu0 0
        %1050 = vmatpush.bf16.msra.mxu0 0
        %1051 = vmatpush.bf16.msra.mxu0 0
        %1052 = vmatpush.bf16.msra.mxu0 0
        %1053 = vmatpush.bf16.msra.mxu0 0
        %1054 = vmatpush.bf16.msra.mxu0 %v1045
        %1055 = vmatmul.bf16.gmra.mxu0 %v1042
        %v1056 = vpop.f32.mrf.mxu0
        %v1057 = vadd.f32 0.0, %v1056
        %v1058 = vpop.f32.mrf.mxu0
        %1059 = vdwg.mxu0
        %v1061 = vsel %vm900, %v1015, 0
        %v1064 = vsel %vm1024, %v1019, 0
        %1066 = vmatpush.bf16.msra.mxu0 0
        %1067 = vmatpush.bf16.msra.mxu0 0
        %1068 = vmatpush.bf16.msra.mxu0 0
        %1069 = vmatpush.bf16.msra.mxu0 0
        %1070 = vmatpush.bf16.msra.mxu0 0
        %1071 = vmatpush.bf16.msra.mxu0 0
        %1072 = vmatpush.bf16.msra.mxu0 0
        %1073 = vmatpush.bf16.msra.mxu0 %v1064
        %1074 = vmatmul.bf16.gmra.mxu0 %v1061
        %v1075 = vpop.f32.mrf.mxu0
        %v1076 = vadd.f32 0.0, %v1075
        %v1077 = vpop.f32.mrf.mxu0
        %1078 = vdwg.mxu0
        %v1080 = vsel %vm900, %v1016, 0
        %v1083 = vsel %vm1024, %v1020, 0
        %1085 = vmatpush.bf16.msra.mxu0 0
        %1086 = vmatpush.bf16.msra.mxu0 0
        %1087 = vmatpush.bf16.msra.mxu0 0
        %1088 = vmatpush.bf16.msra.mxu0 0
        %1089 = vmatpush.bf16.msra.mxu0 0
        %1090 = vmatpush.bf16.msra.mxu0 0
        %1091 = vmatpush.bf16.msra.mxu0 0
        %1092 = vmatpush.bf16.msra.mxu0 %v1083
        %1093 = vmatmul.bf16.gmra.mxu0 %v1080
        %v1094 = vpop.f32.mrf.mxu0
        %v1095 = vadd.f32 0.0, %v1094
        %v1096 = vpop.f32.mrf.mxu0
        %1097 = vdwg.mxu0
        %v1098 = vrcp.pop %v1003
        %v1099 = vrcp.pop %v1006
        %v1100 = vrcp.pop %v1009
        %v1101 = vrcp.pop %v1012
        %v1102 = vmul.f32 %v1038, %v1098
        %v1103 = vmul.f32 %v1057, %v1099
        %v1104 = vmul.f32 %v1076, %v1100
        %v1105 = vmul.f32 %v1095, %v1101
        %1107 = vrot.lane.b32.xlu0 %v1103, 8
        %v1108 = vpop.permute.xlu0 %1107
        %1111 = vrot.lane.b32.xlu0 %v1104, 16
        %v1112 = vpop.permute.xlu0 %1111
        %1115 = vrot.lane.b32.xlu0 %v1105, 24
        %v1116 = vpop.permute.xlu0 %1115
        %v1118 = vsel %vm900, %v1102, %v1108
        %vm1119 = vcmask 130048
        %v1120 = vsel %vm1119, %v1118, %v1112
        %vm1121 = vcmask 195584
        %v1122 = vsel %vm1121, %v1120, %v1116
        %v1123 = vpack.c.bf16 %v1122, %v1122
        %v1124 = vld [vmem:[%s10] sm:$0xf]
        %v1125 = vld [vmem:[%s10 + $0x4] sm:$0xf]
        %v1126 = vld [vmem:[%s10 + $0x8] sm:$0xf]
        %v1127 = vld [vmem:[%s10 + $0xc] sm:$0xf]
        %v1128 = vld [vmem:[%s11] sm:$0x1]
        %v1130 = vperm.slane %v1128, 0
        %v1136 = vunpack.c.l.b16 %v1124
        %v1137 = vunpack.c.l.b16 %v1125
        %v1138 = vunpack.c.l.b16 %v1126
        %v1139 = vunpack.c.l.b16 %v1127
        %v1140 = vpack.c.b16 %v1137, %v1136
        %v1141 = vpack.c.b16 %v1139, %v1138
        %v1145 = vsel %vm793, %v1123, 0
        %1147 = vmatpush.bf16.msra.mxu0 0
        %1148 = vmatpush.bf16.msra.mxu0 0
        %1149 = vmatpush.bf16.msra.mxu0 0
        %1150 = vmatpush.bf16.msra.mxu0 0
        %1151 = vmatpush.bf16.msra.mxu0 0
        %1152 = vmatpush.bf16.msra.mxu0 0
        %1153 = vmatpush.bf16.msra.mxu0 %v1141
        %1154 = vmatpush.bf16.msra.mxu0 %v1140
        %1155 = vmatmul.bf16.gmra.mxu0 %v1145
        %v1156 = vpop.f32.mrf.mxu0
        %v1157 = vadd.f32 %v1130, %v1156
        %v1158 = vpop.f32.mrf.mxu0
        %1159 = vdwg.mxu0
        %v1160 = vadd.f32 %v792, %v1157
        %v1161 = vld [vmem:[%s12] sm:$0x1]
        %v1162 = vld [vmem:[%s13] sm:$0x1]
        %v1163 = vsel %vm793, %v1160, 0.0
        %1164 = vadd.xlane.f32.xlu0 %v1163
        %v1165 = vpop.xlane.xlu0 %1164
        %v1166 = vmul.f32 %v1165, %v803
        %v1167 = vsub.f32 %v1160, %v1166
        %v1168 = vmul.f32 %v1167, %v1167
        %v1169 = vsel %vm793, %v1168, 0.0
        %1170 = vadd.xlane.f32.xlu0 %v1169
        %v1171 = vpop.xlane.xlu0 %1170
        %v1172 = vmul.f32 %v1171, %v803
        %v1173 = vadd.f32 %v1172, 1e-05
        %v1174 = vrsqrt.pop %v1173
        %v1175 = vmul.f32 %v1174, %v1173
        %v1176 = vmul.f32 %v1175, %v1174
        %v1177 = vmul.f32 0.5, %v1176
        %v1178 = vsub.f32 1.5, %v1177
        %v1179 = vmul.f32 %v1174, %v1178
        %vm1180 = vweird.f32 %v1173
        %vm1181 = vweird.f32 %v1174
        %vm1182 = vmor %vm1180, %vm1181
        %v1183 = vsel %vm1182, %v1174, %v1179
        %v1184 = vmul.f32 %v1167, %v1183
        %v1186 = vperm.slane %v1161, 0
        %v1188 = vmul.f32 %v1184, %v1186
        %v1190 = vperm.slane %v1162, 0
        %v1192 = vadd.f32 %v1188, %v1190
        %v1193 = vpack.c.bf16 %v1192, %v1192
        %v1194 = vld [vmem:[#allocation7] sm:$0xf]
        %v1195 = vld [vmem:[#allocation7 + $0x4] sm:$0xf]
        %v1196 = vld [vmem:[#allocation7 + $0x8] sm:$0xf]
        %v1197 = vld [vmem:[#allocation7 + $0xc] sm:$0xf]
        %v1198 = vld [vmem:[%s15] sm:$0x1]
        %v1200 = vperm.slane %v1198, 0
        %v1206 = vunpack.c.l.b16 %v1194
        %v1207 = vunpack.c.l.b16 %v1195
        %v1208 = vunpack.c.l.b16 %v1196
        %v1209 = vunpack.c.l.b16 %v1197
        %v1210 = vpack.c.b16 %v1207, %v1206
        %v1211 = vpack.c.b16 %v1209, %v1208
        %v1215 = vsel %vm793, %v1193, 0
        %1217 = vmatpush.bf16.msra.mxu0 0
        %1218 = vmatpush.bf16.msra.mxu0 0
        %1219 = vmatpush.bf16.msra.mxu0 0
        %1220 = vmatpush.bf16.msra.mxu0 0
        %1221 = vmatpush.bf16.msra.mxu0 0
        %1222 = vmatpush.bf16.msra.mxu0 0
        %1223 = vmatpush.bf16.msra.mxu0 %v1211
        %1224 = vmatpush.bf16.msra.mxu0 %v1210
        %1225 = vmatmul.bf16.gmra.mxu0 %v1215
        %v1226 = vpop.f32.mrf.mxu0
        %v1227 = vadd.f32 %v1200, %v1226
        %v1228 = vpop.f32.mrf.mxu0
        %1229 = vdwg.mxu0
        %v1230 = vmul.f32 %v1227, 0.5
        %v1231 = vmul.f32 %v1227, 0.044715
        %v1232 = vmul.f32 %v1231, %v1227
        %v1233 = vmul.f32 %v1232, %v1227
        %v1234 = vadd.f32 %v1227, %v1233
        %v1235 = vmul.f32 %v1234, 0.7978846
        %v1236 = vtanh.pop %v1235
        %v1237 = vadd.f32 %v1236, 1.0
        %v1238 = vmul.f32 %v1230, %v1237
        %v1239 = vpack.c.bf16 %v1238, %v1238
        %v1240 = vld [vmem:[%s16] sm:$0xf]
        %v1241 = vld [vmem:[%s16 + $0x4] sm:$0xf]
        %v1242 = vld [vmem:[%s16 + $0x8] sm:$0xf]
        %v1243 = vld [vmem:[%s16 + $0xc] sm:$0xf]
        %v1244 = vld [vmem:[%s16 + $0x10] sm:$0xf]
        %v1245 = vld [vmem:[%s16 + $0x14] sm:$0xf]
        %v1246 = vld [vmem:[%s16 + $0x18] sm:$0xf]
        %v1247 = vld [vmem:[%s16 + $0x1c] sm:$0xf]
        %v1248 = vld [vmem:[%s16 + $0x20] sm:$0xf]
        %v1249 = vld [vmem:[%s16 + $0x24] sm:$0xf]
        %v1250 = vld [vmem:[%s16 + $0x28] sm:$0xf]
        %v1251 = vld [vmem:[%s16 + $0x2c] sm:$0xf]
        %v1252 = vld [vmem:[%s16 + $0x30] sm:$0xf]
        %v1253 = vld [vmem:[%s16 + $0x34] sm:$0xf]
        %v1254 = vld [vmem:[%s16 + $0x38] sm:$0xf]
        %v1255 = vld [vmem:[%s16 + $0x3c] sm:$0xf]
        %v1256 = vld [vmem:[%s17] sm:$0x1]
        %v1258 = vperm.slane %v1256, 0
        %v1276 = vunpack.c.l.b16 %v1240
        %v1277 = vunpack.c.l.b16 %v1241
        %v1278 = vunpack.c.l.b16 %v1242
        %v1279 = vunpack.c.l.b16 %v1243
        %v1280 = vunpack.c.l.b16 %v1244
        %v1281 = vunpack.c.l.b16 %v1245
        %v1282 = vunpack.c.l.b16 %v1246
        %v1283 = vunpack.c.l.b16 %v1247
        %v1284 = vunpack.c.l.b16 %v1248
        %v1285 = vunpack.c.l.b16 %v1249
        %v1286 = vunpack.c.l.b16 %v1250
        %v1287 = vunpack.c.l.b16 %v1251
        %v1288 = vunpack.c.l.b16 %v1252
        %v1289 = vunpack.c.l.b16 %v1253
        %v1290 = vunpack.c.l.b16 %v1254
        %v1291 = vunpack.c.l.b16 %v1255
        %v1292 = vpack.c.b16 %v1277, %v1276
        %v1293 = vpack.c.b16 %v1279, %v1278
        %v1294 = vpack.c.b16 %v1281, %v1280
        %v1295 = vpack.c.b16 %v1283, %v1282
        %v1296 = vpack.c.b16 %v1285, %v1284
        %v1297 = vpack.c.b16 %v1287, %v1286
        %v1298 = vpack.c.b16 %v1289, %v1288
        %v1299 = vpack.c.b16 %v1291, %v1290
        %1308 = vmatpush.bf16.msra.mxu0 %v1299
        %1309 = vmatpush.bf16.msra.mxu0 %v1298
        %1310 = vmatpush.bf16.msra.mxu0 %v1297
        %1311 = vmatpush.bf16.msra.mxu0 %v1296
        %1312 = vmatpush.bf16.msra.mxu0 %v1295
        %1313 = vmatpush.bf16.msra.mxu0 %v1294
        %1314 = vmatpush.bf16.msra.mxu0 %v1293
        %1315 = vmatpush.bf16.msra.mxu0 %v1292
        %1316 = vmatmul.bf16.gmra.mxu0 %v1239
        %v1317 = vpop.f32.mrf.mxu0
        %v1318 = vadd.f32 %v1258, %v1317
        %v1319 = vpop.f32.mrf.mxu0
        %1320 = vdwg.mxu0
        %v1321 = vadd.f32 %v1160, %v1318
        %1322 = vst.msk [vmem:[%s632] sm:$0xff] %vm793, %v1321
        %s1323 = sand.u32 %s446, 1
        %s1324 = scalar_lea.sflag [#allocation6], %s1323
        %s1325 = sand.u32 %s446, 1
        %s1326 = smul.addr %s1325, 8
        %s1327 = scalar_lea.vmem [#allocation9], %s1326
        // Predicated region
        $region105: #{tpu_custom_call.1} parent=91 // pred_check
          %p1328 = pneg %p456
        $region106: #{tpu_custom_call.1} parent=91 // pred_check_branch
          %1330 = sbr.rel (%p1328) target = $region108
        $region107: #{tpu_custom_call.1} parent=91 // pred_region
          %1332 = vsyncadd %s1324, 0
          %s1333 = sadd.s32 %s41, %s40
          %s1334 = smul.addr %s1333, 8
          %s1335 = scalar_lea.hbm %s18, %s1334
          %s1337 = sshll.u32 %s1327, 4
          %s1338 = int_to_ptr.vmem [resolvable:$true] %s1337
          %s1339 = sshll.u32 %s1335, 4
          %s1340 = int_to_ptr.hbm [resolvable:$true] %s1339
          %1342 = dma.vmem_to_hbm [thread:$0]  %s1338, 128, %s1340, %s1324
        $region108: #{tpu_custom_call.1} parent=91 // pred_fallthru
          _
      $region92: #{tpu_custom_call.1} parent=5 // pred_fallthru
        _
      %p1343 = scmp.le.s32.totalorder 2, %s31
      // Predicated region
      $region109: #{tpu_custom_call.1} parent=5 // pred_check
        %p1344 = pneg %p1343
      $region110: #{tpu_custom_call.1} parent=5 // pred_check_branch
        %1346 = sbr.rel (%p1344) target = $region112
      $region111: #{tpu_custom_call.1} parent=5 // pred_region
        %s1347 = ssub.s32 %s31, 2
        // Predicated region
        $region113: #{tpu_custom_call.1} parent=111 // pred_check
          %p1348 = pneg %p462
        $region114: #{tpu_custom_call.1} parent=111 // pred_check_branch
          %1350 = sbr.rel (%p1348) target = $region116
        $region115: #{tpu_custom_call.1} parent=111 // pred_region
          %s1351 = sand.u32 %s447, 1
          %s1352 = scalar_lea.sflag [#allocation6], %s1351
          %s1353 = sand.u32 %s447, 1
          %s1354 = smul.addr %s1353, 8
          %s1355 = scalar_lea.vmem [#allocation9], %s1354
          %1357 = dma.done %s1352, 128
        $region116: #{tpu_custom_call.1} parent=111 // pred_fallthru
          _
      $region112: #{tpu_custom_call.1} parent=5 // pred_fallthru
        _
    $region6: #{tpu_custom_call.1} parent=1 // loop_footer
      %s35 = sadd.s32 1, %s31
    $region7: #{tpu_custom_call.1} parent=1 // loop_footer_branch
      %30 = sbr.rel target = $region3
    $region8: #{tpu_custom_call.1} parent=1 // loop_exit
      _
    %1358 = vsyncpa [#allocation5], 1
    %s1359 = scalar_lea.sflag [#allocation5], 1
    %1360 = vsyncpa %s1359, 1
    %1361 = vsyncpa [#allocation8], 1
    %1362 = vsyncpa [#allocation6], 1
    %s1363 = scalar_lea.sflag [#allocation6], 1
    %1364 = vsyncpa %s1363, 1

</llo_original>
